<compile_context>
chip_gen: v5e
topology: v5e:2x2
jax: 0.10.0
libtpu: 0.0.40
codegen_flags: <defaults>
</compile_context>

<pallas_src>
import math
import functools

import jax
import jax.numpy as jnp
from jax.experimental import pallas as pl
from jax.experimental.pallas import tpu as pltpu


def _layernorm(v, gamma, beta, eps=1e-5):
    # PyTorch nn.LayerNorm: biased variance, eps inside the sqrt.
    mu = jnp.mean(v, axis=-1, keepdims=True)
    var = jnp.mean((v - mu) ** 2, axis=-1, keepdims=True)
    return (v - mu) * jax.lax.rsqrt(var + eps) * gamma + beta


def _gelu(x):
    # TODO(synk): PyTorch nn.GELU() defaults to the exact erf form; the tanh
    # approximation is used for guaranteed Mosaic/EUP lowering (~1e-3 diff).
    c = math.sqrt(2.0 / math.pi)
    return 0.5 * x * (1.0 + jnp.tanh(c * (x + 0.044715 * x * x * x)))


def _encoder_kernel(x_ref,
                    ln1g_ref, ln1b_ref,
                    wq_ref, bq_ref, wk_ref, bk_ref, wv_ref, bv_ref,
                    wo_ref, bo_ref,
                    ln2g_ref, ln2b_ref,
                    w1_ref, b1_ref, w2_ref, b2_ref,
                    out_ref,
                    *, heads, compute_dtype):
    f32 = jnp.float32
    x = x_ref[0].astype(f32)                                  # (N, D) residual stream in f32
    N, D = x.shape

    # ---- norm1 + multi-head attention (heads batched, no per-head loop) ----
    h1 = _layernorm(x, ln1g_ref[0], ln1b_ref[0])              # f32 statistics
    hb = jnp.broadcast_to(h1.astype(compute_dtype), (heads, N, D))   # (H, N, D)

    # Attention scale is pre-folded into wq / bq by the wrapper.
    q = jnp.einsum("hnd,hde->hne", hb, wq_ref[...],
                   preferred_element_type=f32) + bq_ref[...]  # (H, N, hd)
    k = jnp.einsum("hnd,hde->hne", hb, wk_ref[...],
                   preferred_element_type=f32) + bk_ref[...]
    v = jnp.einsum("hnd,hde->hne", hb, wv_ref[...],
                   preferred_element_type=f32) + bv_ref[...]

    dots = jnp.einsum("hqd,hkd->hqk",
                      q.astype(compute_dtype), k.astype(compute_dtype),
                      preferred_element_type=f32)             # (H, N, N) f32 scores
    dots = dots - jnp.max(dots, axis=-1, keepdims=True)
    p = jnp.exp(dots)
    p = p * pl.reciprocal(jnp.sum(p, axis=-1, keepdims=True), approx=True)   # EUP divide

    ctx = jnp.einsum("hqk,hkd->hqd",
                     p.astype(compute_dtype), v.astype(compute_dtype),
                     preferred_element_type=f32)              # (H, N, hd)

    # Output projection folded per head against wo reshaped to (H, hd, D),
    # then reduced over heads (replaces slice + concatenate + 2D matmul).
    proj_h = jnp.einsum("hqd,hdo->hqo",
                        ctx.astype(compute_dtype), wo_ref[...],
                        preferred_element_type=f32)           # (H, N, D)
    proj = jnp.sum(proj_h, axis=0) + bo_ref[0]
    x1 = proj + x                                             # first residual (f32)

    # ---- norm2 + feedforward ----
    h2 = _layernorm(x1, ln2g_ref[0], ln2b_ref[0]).astype(compute_dtype)
    f = jnp.dot(h2, w1_ref[...], preferred_element_type=f32) + b1_ref[0]
    f = _gelu(f)
    y = jnp.dot(f.astype(compute_dtype), w2_ref[...], preferred_element_type=f32) + b2_ref[0]

    out_ref[0] = (x1 + y).astype(out_ref.dtype)               # second residual


def _prep_params(params, heads, compute_dtype):
    """Head-major weight layouts, scale folding, dtype casts (runs in XLA, once)."""
    D, threeD = params["wqkv"].shape
    assert threeD == 3 * D and D % heads == 0
    hd = D // heads
    scale = hd ** -0.5
    f32 = jnp.float32

    wqkv = params["wqkv"]                 # (D, 3D), columns = [q | k | v], each (h d)
    bqkv = params["bqkv"].reshape(-1)     # (3D,)

    def head_w(w2d):                      # (D, D) -> (heads, D, hd)
        return jnp.transpose(w2d.reshape(D, heads, hd), (1, 0, 2))

    def head_b(b1d):                      # (D,) -> (heads, 1, hd)
        return b1d.reshape(heads, 1, hd)

    return dict(
        ln1_g=params["ln1_g"].astype(f32), ln1_b=params["ln1_b"].astype(f32),
        wq=head_w(wqkv[:, 0 * D:1 * D] * scale).astype(compute_dtype),   # scale folded
        bq=(head_b(bqkv[0 * D:1 * D]) * scale).astype(f32),
        wk=head_w(wqkv[:, 1 * D:2 * D]).astype(compute_dtype),
        bk=head_b(bqkv[1 * D:2 * D]).astype(f32),
        wv=head_w(wqkv[:, 2 * D:3 * D]).astype(compute_dtype),
        bv=head_b(bqkv[2 * D:3 * D]).astype(f32),
        wo=params["wo"].reshape(heads, hd, D).astype(compute_dtype),
        bo=params["bo"].astype(f32),
        ln2_g=params["ln2_g"].astype(f32), ln2_b=params["ln2_b"].astype(f32),
        w1=params["w1"].astype(compute_dtype), b1=params["b1"].astype(f32),
        w2=params["w2"].astype(compute_dtype), b2=params["b2"].astype(f32),
    )


def transformer_encoder_layer(x, params, *, heads, vmem_limit_bytes=32 * 1024 * 1024):
    B, N, D = x.shape
    M = params["w1"].shape[1]
    hd = D // heads
    compute_dtype = jnp.dtype(x.dtype)    # bf16 in -> bf16 MXU operands, f32 accumulate
    p = _prep_params(params, heads, compute_dtype)

    kernel = functools.partial(_encoder_kernel, heads=heads, compute_dtype=compute_dtype)

    const = lambda shape: pl.BlockSpec(shape, lambda b, _s=shape: (0,) * len(_s))

    in_specs = [
        pl.BlockSpec((1, N, D), lambda b: (b, 0, 0)),      # x (per-batch tile)
        const((1, D)), const((1, D)),                      # ln1 gamma / beta
        const((heads, D, hd)), const((heads, 1, hd)),      # wq / bq (scale folded)
        const((heads, D, hd)), const((heads, 1, hd)),      # wk / bk
        const((heads, D, hd)), const((heads, 1, hd)),      # wv / bv
        const((heads, hd, D)), const((1, D)),              # wo / bo
        const((1, D)), const((1, D)),                      # ln2 gamma / beta
        const((D, M)), const((1, M)),                      # mlp1 weight / bias
        const((M, D)), const((1, D)),                      # mlp2 weight / bias
    ]

    return pl.pallas_call(
        kernel,
        out_shape=jax.ShapeDtypeStruct((B, N, D), x.dtype),
        grid=(B,),
        in_specs=in_specs,
        out_specs=pl.BlockSpec((1, N, D), lambda b: (b, 0, 0)),
        compiler_params=pltpu.CompilerParams(
            # batch grid is "parallel" so v7x's two TensorCores both get work (keep B >= 2)
            dimension_semantics=("parallel",),
            # raise for ViT-Base-scale weights (e.g. 96 MiB on v5e/v6e, ~48 MiB on v7x)
            vmem_limit_bytes=vmem_limit_bytes,
        ),
    )(x,
      p["ln1_g"], p["ln1_b"],
      p["wq"], p["bq"], p["wk"], p["bk"], p["wv"], p["bv"],
      p["wo"], p["bo"],
      p["ln2_g"], p["ln2_b"],
      p["w1"], p["b1"], p["w2"], p["b2"])


def init_params(key, hidden_dim, mlp_dim):
    D, M = hidden_dim, mlp_dim
    ks = jax.random.split(key, 8)
    s = lambda fan_in: 1.0 / math.sqrt(fan_in)
    return {
        "ln1_g": jnp.ones((1, D), jnp.float32),
        "ln1_b": jnp.zeros((1, D), jnp.float32),
        # weights stored as (in, out): y = x @ W + b  (== PyTorch x @ W.T + b)
        "wqkv": jax.random.uniform(ks[0], (D, 3 * D), jnp.float32, -s(D), s(D)),
        "bqkv": jax.random.uniform(ks[1], (1, 3 * D), jnp.float32, -s(D), s(D)),
        "wo":   jax.random.uniform(ks[2], (D, D), jnp.float32, -s(D), s(D)),
        "bo":   jax.random.uniform(ks[3], (1, D), jnp.float32, -s(D), s(D)),
        "ln2_g": jnp.ones((1, D), jnp.float32),
        "ln2_b": jnp.zeros((1, D), jnp.float32),
        "w1":   jax.random.uniform(ks[4], (D, M), jnp.float32, -s(D), s(D)),
        "b1":   jax.random.uniform(ks[5], (1, M), jnp.float32, -s(D), s(D)),
        "w2":   jax.random.uniform(ks[6], (M, D), jnp.float32, -s(M), s(M)),
        "b2":   jax.random.uniform(ks[7], (1, D), jnp.float32, -s(M), s(M)),
    }


def reference(x, p, heads):
    """Plain-JAX reference (standard head layout, explicit scale, exact softmax)."""
    D = x.shape[-1]
    dh = D // heads
    ln = lambda v, g, b: _layernorm(v, g[0], b[0])
    h = ln(x, p["ln1_g"], p["ln1_b"])
    qkv = h @ p["wqkv"] + p["bqkv"][0]
    q, k, v = jnp.split(qkv, 3, axis=-1)
    resh = lambda t: t.reshape(t.shape[0], t.shape[1], heads, dh).transpose(0, 2, 1, 3)
    q, k, v = resh(q), resh(k), resh(v)
    dots = jnp.einsum("bhid,bhjd->bhij", q, k) * dh ** -0.5
    attn = jax.nn.softmax(dots, axis=-1)
    out = jnp.einsum("bhij,bhjd->bhid", attn, v)
    out = out.transpose(0, 2, 1, 3).reshape(x.shape)
    out = out @ p["wo"] + p["bo"][0]
    x1 = out + x
    h2 = ln(x1, p["ln2_g"], p["ln2_b"])
    f = _gelu(h2 @ p["w1"] + p["b1"][0]) @ p["w2"] + p["b2"][0]
    return x1 + f


if __name__ == "__main__":
    B, N, D, M, HEADS = 2, 8, 32, 64, 4

    key = jax.random.PRNGKey(0)
    kx, kp = jax.random.split(key)
    x = jax.random.normal(kx, (B, N, D), jnp.float32)
    params = init_params(kp, D, M)
    ref = reference(x, params, HEADS)

    # f32 path (tight check; small slack for approx-reciprocal softmax normalization)
    out = jax.block_until_ready(transformer_encoder_layer(x, params, heads=HEADS))
    assert out.shape == (B, N, D)
    assert jnp.allclose(out, ref, atol=5e-3, rtol=5e-3), "f32 mismatch vs reference"

    # bf16 path: bf16 MXU operands, f32 accumulation / LN / softmax stats (loose check)
    out_bf = jax.block_until_ready(
        transformer_encoder_layer(x.astype(jnp.bfloat16), params, heads=HEADS))
    assert out_bf.dtype == jnp.bfloat16
    assert jnp.allclose(out_bf.astype(jnp.float32), ref, atol=0.25, rtol=0.25), \
        "bf16 mismatch vs reference"

    print("KERNEL_OK")
</pallas_src>

<mosaic_0001>
module attributes {stable_mosaic.version = 11 : i64} {
  func.func @_encoder_kernel(%arg0: i32, %arg1: memref<1x8x32xf32, #tpu.memory_space<vmem>>, %arg2: memref<1x32xf32, #tpu.memory_space<vmem>>, %arg3: memref<1x32xf32, #tpu.memory_space<vmem>>, %arg4: memref<4x32x8xf32, #tpu.memory_space<vmem>>, %arg5: memref<4x1x8xf32, #tpu.memory_space<vmem>>, %arg6: memref<4x32x8xf32, #tpu.memory_space<vmem>>, %arg7: memref<4x1x8xf32, #tpu.memory_space<vmem>>, %arg8: memref<4x32x8xf32, #tpu.memory_space<vmem>>, %arg9: memref<4x1x8xf32, #tpu.memory_space<vmem>>, %arg10: memref<4x8x32xf32, #tpu.memory_space<vmem>>, %arg11: memref<1x32xf32, #tpu.memory_space<vmem>>, %arg12: memref<1x32xf32, #tpu.memory_space<vmem>>, %arg13: memref<1x32xf32, #tpu.memory_space<vmem>>, %arg14: memref<32x64xf32, #tpu.memory_space<vmem>>, %arg15: memref<1x64xf32, #tpu.memory_space<vmem>>, %arg16: memref<64x32xf32, #tpu.memory_space<vmem>>, %arg17: memref<1x32xf32, #tpu.memory_space<vmem>>, %arg18: memref<1x8x32xf32, #tpu.memory_space<vmem>>) attributes {dimension_semantics = [#tpu.dimension_semantics<parallel>], iteration_bounds = array<i64: 2>, scalar_prefetch = 0 : i64, scratch_operands = 0 : i64, tpu.core_type = #tpu.core_type<tc>, window_params = [{transform_indices = @transform_0, window_bounds = array<i64: 1, 8, 32>}, {pipeline_mode = #tpu.pipeline_mode<synchronous>, transform_indices = @transform_1, window_bounds = array<i64: 1, 32>}, {pipeline_mode = #tpu.pipeline_mode<synchronous>, transform_indices = @transform_2, window_bounds = array<i64: 1, 32>}, {pipeline_mode = #tpu.pipeline_mode<synchronous>, transform_indices = @transform_3, window_bounds = array<i64: 4, 32, 8>}, {pipeline_mode = #tpu.pipeline_mode<synchronous>, transform_indices = @transform_4, window_bounds = array<i64: 4, 1, 8>}, {pipeline_mode = #tpu.pipeline_mode<synchronous>, transform_indices = @transform_5, window_bounds = array<i64: 4, 32, 8>}, {pipeline_mode = #tpu.pipeline_mode<synchronous>, transform_indices = @transform_6, window_bounds = array<i64: 4, 1, 8>}, {pipeline_mode = #tpu.pipeline_mode<synchronous>, transform_indices = @transform_7, window_bounds = array<i64: 4, 32, 8>}, {pipeline_mode = #tpu.pipeline_mode<synchronous>, transform_indices = @transform_8, window_bounds = array<i64: 4, 1, 8>}, {pipeline_mode = #tpu.pipeline_mode<synchronous>, transform_indices = @transform_9, window_bounds = array<i64: 4, 8, 32>}, {pipeline_mode = #tpu.pipeline_mode<synchronous>, transform_indices = @transform_10, window_bounds = array<i64: 1, 32>}, {pipeline_mode = #tpu.pipeline_mode<synchronous>, transform_indices = @transform_11, window_bounds = array<i64: 1, 32>}, {pipeline_mode = #tpu.pipeline_mode<synchronous>, transform_indices = @transform_12, window_bounds = array<i64: 1, 32>}, {pipeline_mode = #tpu.pipeline_mode<synchronous>, transform_indices = @transform_13, window_bounds = array<i64: 32, 64>}, {pipeline_mode = #tpu.pipeline_mode<synchronous>, transform_indices = @transform_14, window_bounds = array<i64: 1, 64>}, {pipeline_mode = #tpu.pipeline_mode<synchronous>, transform_indices = @transform_15, window_bounds = array<i64: 64, 32>}, {pipeline_mode = #tpu.pipeline_mode<synchronous>, transform_indices = @transform_16, window_bounds = array<i64: 1, 32>}, {transform_indices = @transform_17, window_bounds = array<i64: 1, 8, 32>}]} {
    %c0 = arith.constant 0 : index
    %c0_0 = arith.constant 0 : index
    %c0_1 = arith.constant 0 : index
    %0 = vector.load %arg1[%c0, %c0_0, %c0_1] : memref<1x8x32xf32, #tpu.memory_space<vmem>>, vector<1x8x32xf32>
    %1 = vector.shape_cast %0 : vector<1x8x32xf32> to vector<8x32xf32>
    %c0_2 = arith.constant 0 : index
    %c0_3 = arith.constant 0 : index
    %2 = vector.load %arg2[%c0_2, %c0_3] : memref<1x32xf32, #tpu.memory_space<vmem>>, vector<1x32xf32>
    %3 = vector.shape_cast %2 : vector<1x32xf32> to vector<32xf32>
    %c0_4 = arith.constant 0 : index
    %c0_5 = arith.constant 0 : index
    %4 = vector.load %arg3[%c0_4, %c0_5] : memref<1x32xf32, #tpu.memory_space<vmem>>, vector<1x32xf32>
    %5 = vector.shape_cast %4 : vector<1x32xf32> to vector<32xf32>
    %cst = arith.constant dense<0.000000e+00> : vector<8xf32>
    %6 = vector.multi_reduction <add>, %1, %cst [1] : vector<8x32xf32> to vector<8xf32>
    %7 = vector.shape_cast %6 : vector<8xf32> to vector<8x1xf32>
    %cst_6 = arith.constant 3.200000e+01 : f32
    %8 = vector.broadcast %cst_6 : f32 to vector<8x1xf32>
    %9 = arith.divf %7, %8 : vector<8x1xf32>
    %10 = vector.broadcast %9 : vector<8x1xf32> to vector<8x32xf32>
    %11 = arith.subf %1, %10 : vector<8x32xf32>
    %12 = arith.mulf %11, %11 : vector<8x32xf32>
    %cst_7 = arith.constant dense<0.000000e+00> : vector<8xf32>
    %13 = vector.multi_reduction <add>, %12, %cst_7 [1] : vector<8x32xf32> to vector<8xf32>
    %14 = vector.shape_cast %13 : vector<8xf32> to vector<8x1xf32>
    %cst_8 = arith.constant 3.200000e+01 : f32
    %15 = vector.broadcast %cst_8 : f32 to vector<8x1xf32>
    %16 = arith.divf %14, %15 : vector<8x1xf32>
    %17 = vector.broadcast %9 : vector<8x1xf32> to vector<8x32xf32>
    %18 = arith.subf %1, %17 : vector<8x32xf32>
    %cst_9 = arith.constant 9.99999974E-6 : f32
    %19 = vector.broadcast %cst_9 : f32 to vector<8x1xf32>
    %20 = arith.addf %16, %19 : vector<8x1xf32>
    %21 = math.rsqrt %20 : vector<8x1xf32>
    %22 = vector.broadcast %21 : vector<8x1xf32> to vector<8x32xf32>
    %23 = arith.mulf %18, %22 : vector<8x32xf32>
    %24 = vector.shape_cast %3 : vector<32xf32> to vector<1x32xf32>
    %25 = vector.broadcast %24 : vector<1x32xf32> to vector<8x32xf32>
    %26 = arith.mulf %23, %25 : vector<8x32xf32>
    %27 = vector.shape_cast %5 : vector<32xf32> to vector<1x32xf32>
    %28 = vector.broadcast %27 : vector<1x32xf32> to vector<8x32xf32>
    %29 = arith.addf %26, %28 : vector<8x32xf32>
    %30 = vector.shape_cast %29 : vector<8x32xf32> to vector<1x8x32xf32>
    %31 = vector.broadcast %30 : vector<1x8x32xf32> to vector<4x8x32xf32>
    %c0_10 = arith.constant 0 : index
    %c0_11 = arith.constant 0 : index
    %c0_12 = arith.constant 0 : index
    %32 = vector.load %arg4[%c0_10, %c0_11, %c0_12] : memref<4x32x8xf32, #tpu.memory_space<vmem>>, vector<4x32x8xf32>
    "tpu.trace_start"() <{level = 10 : i32, message = "hnd,hde->hne"}> : () -> ()
    %cst_13 = arith.constant dense<0.000000e+00> : vector<4x8x8xf32>
    %33 = tpu.matmul %31, %32, %cst_13 {dimension_numbers = #tpu.dot_dimension_numbers<[2], [1], [1], [2], [0, 0, 0, 1, 1, 2], [0], [0]>} : vector<4x8x32xf32>, vector<4x32x8xf32>, vector<4x8x8xf32> -> vector<4x8x8xf32>
    "tpu.trace_stop"() : () -> ()
    %c0_14 = arith.constant 0 : index
    %c0_15 = arith.constant 0 : index
    %c0_16 = arith.constant 0 : index
    %34 = vector.load %arg5[%c0_14, %c0_15, %c0_16] : memref<4x1x8xf32, #tpu.memory_space<vmem>>, vector<4x1x8xf32>
    %35 = vector.broadcast %34 : vector<4x1x8xf32> to vector<4x8x8xf32>
    %36 = arith.addf %33, %35 : vector<4x8x8xf32>
    %c0_17 = arith.constant 0 : index
    %c0_18 = arith.constant 0 : index
    %c0_19 = arith.constant 0 : index
    %37 = vector.load %arg6[%c0_17, %c0_18, %c0_19] : memref<4x32x8xf32, #tpu.memory_space<vmem>>, vector<4x32x8xf32>
    "tpu.trace_start"() <{level = 10 : i32, message = "hnd,hde->hne"}> : () -> ()
    %cst_20 = arith.constant dense<0.000000e+00> : vector<4x8x8xf32>
    %38 = tpu.matmul %31, %37, %cst_20 {dimension_numbers = #tpu.dot_dimension_numbers<[2], [1], [1], [2], [0, 0, 0, 1, 1, 2], [0], [0]>} : vector<4x8x32xf32>, vector<4x32x8xf32>, vector<4x8x8xf32> -> vector<4x8x8xf32>
    "tpu.trace_stop"() : () -> ()
    %c0_21 = arith.constant 0 : index
    %c0_22 = arith.constant 0 : index
    %c0_23 = arith.constant 0 : index
    %39 = vector.load %arg7[%c0_21, %c0_22, %c0_23] : memref<4x1x8xf32, #tpu.memory_space<vmem>>, vector<4x1x8xf32>
    %40 = vector.broadcast %39 : vector<4x1x8xf32> to vector<4x8x8xf32>
    %41 = arith.addf %38, %40 : vector<4x8x8xf32>
    %c0_24 = arith.constant 0 : index
    %c0_25 = arith.constant 0 : index
    %c0_26 = arith.constant 0 : index
    %42 = vector.load %arg8[%c0_24, %c0_25, %c0_26] : memref<4x32x8xf32, #tpu.memory_space<vmem>>, vector<4x32x8xf32>
    "tpu.trace_start"() <{level = 10 : i32, message = "hnd,hde->hne"}> : () -> ()
    %cst_27 = arith.constant dense<0.000000e+00> : vector<4x8x8xf32>
    %43 = tpu.matmul %31, %42, %cst_27 {dimension_numbers = #tpu.dot_dimension_numbers<[2], [1], [1], [2], [0, 0, 0, 1, 1, 2], [0], [0]>} : vector<4x8x32xf32>, vector<4x32x8xf32>, vector<4x8x8xf32> -> vector<4x8x8xf32>
    "tpu.trace_stop"() : () -> ()
    %c0_28 = arith.constant 0 : index
    %c0_29 = arith.constant 0 : index
    %c0_30 = arith.constant 0 : index
    %44 = vector.load %arg9[%c0_28, %c0_29, %c0_30] : memref<4x1x8xf32, #tpu.memory_space<vmem>>, vector<4x1x8xf32>
    %45 = vector.broadcast %44 : vector<4x1x8xf32> to vector<4x8x8xf32>
    %46 = arith.addf %43, %45 : vector<4x8x8xf32>
    "tpu.trace_start"() <{level = 10 : i32, message = "hqd,hkd->hqk"}> : () -> ()
    %cst_31 = arith.constant dense<0.000000e+00> : vector<4x8x8xf32>
    %47 = tpu.matmul %36, %41, %cst_31 {dimension_numbers = #tpu.dot_dimension_numbers<[2], [2], [1], [1], [0, 0, 0, 1, 1, 1], [0], [0]>} : vector<4x8x8xf32>, vector<4x8x8xf32>, vector<4x8x8xf32> -> vector<4x8x8xf32>
    "tpu.trace_stop"() : () -> ()
    %cst_32 = arith.constant dense<0xFF800000> : vector<4x8xf32>
    %48 = vector.multi_reduction <maximumf>, %47, %cst_32 [2] : vector<4x8x8xf32> to vector<4x8xf32>
    %49 = vector.shape_cast %48 : vector<4x8xf32> to vector<4x8x1xf32>
    %50 = vector.broadcast %49 : vector<4x8x1xf32> to vector<4x8x8xf32>
    %51 = arith.subf %47, %50 : vector<4x8x8xf32>
    %52 = math.exp %51 : vector<4x8x8xf32>
    %cst_33 = arith.constant dense<0.000000e+00> : vector<4x8xf32>
    %53 = vector.multi_reduction <add>, %52, %cst_33 [2] : vector<4x8x8xf32> to vector<4x8xf32>
    %54 = vector.shape_cast %53 : vector<4x8xf32> to vector<4x8x1xf32>
    %55 = tpu.reciprocal %54 {approx = true} : vector<4x8x1xf32> -> vector<4x8x1xf32>
    %56 = vector.broadcast %55 : vector<4x8x1xf32> to vector<4x8x8xf32>
    %57 = arith.mulf %52, %56 : vector<4x8x8xf32>
    "tpu.trace_start"() <{level = 10 : i32, message = "hqk,hkd->hqd"}> : () -> ()
    %cst_34 = arith.constant dense<0.000000e+00> : vector<4x8x8xf32>
    %58 = tpu.matmul %57, %46, %cst_34 {dimension_numbers = #tpu.dot_dimension_numbers<[2], [1], [1], [2], [0, 0, 0, 1, 1, 2], [0], [0]>} : vector<4x8x8xf32>, vector<4x8x8xf32>, vector<4x8x8xf32> -> vector<4x8x8xf32>
    "tpu.trace_stop"() : () -> ()
    %c0_35 = arith.constant 0 : index
    %c0_36 = arith.constant 0 : index
    %c0_37 = arith.constant 0 : index
    %59 = vector.load %arg10[%c0_35, %c0_36, %c0_37] : memref<4x8x32xf32, #tpu.memory_space<vmem>>, vector<4x8x32xf32>
    "tpu.trace_start"() <{level = 10 : i32, message = "hqd,hdo->hqo"}> : () -> ()
    %cst_38 = arith.constant dense<0.000000e+00> : vector<4x8x32xf32>
    %60 = tpu.matmul %58, %59, %cst_38 {dimension_numbers = #tpu.dot_dimension_numbers<[2], [1], [1], [2], [0, 0, 0, 1, 1, 2], [0], [0]>} : vector<4x8x8xf32>, vector<4x8x32xf32>, vector<4x8x32xf32> -> vector<4x8x32xf32>
    "tpu.trace_stop"() : () -> ()
    %cst_39 = arith.constant dense<0.000000e+00> : vector<8x32xf32>
    %61 = vector.multi_reduction <add>, %60, %cst_39 [0] : vector<4x8x32xf32> to vector<8x32xf32>
    %c0_40 = arith.constant 0 : index
    %c0_41 = arith.constant 0 : index
    %62 = vector.load %arg11[%c0_40, %c0_41] : memref<1x32xf32, #tpu.memory_space<vmem>>, vector<1x32xf32>
    %63 = vector.shape_cast %62 : vector<1x32xf32> to vector<32xf32>
    %64 = vector.shape_cast %63 : vector<32xf32> to vector<1x32xf32>
    %65 = vector.broadcast %64 : vector<1x32xf32> to vector<8x32xf32>
    %66 = arith.addf %61, %65 : vector<8x32xf32>
    %67 = arith.addf %66, %1 : vector<8x32xf32>
    %c0_42 = arith.constant 0 : index
    %c0_43 = arith.constant 0 : index
    %68 = vector.load %arg12[%c0_42, %c0_43] : memref<1x32xf32, #tpu.memory_space<vmem>>, vector<1x32xf32>
    %69 = vector.shape_cast %68 : vector<1x32xf32> to vector<32xf32>
    %c0_44 = arith.constant 0 : index
    %c0_45 = arith.constant 0 : index
    %70 = vector.load %arg13[%c0_44, %c0_45] : memref<1x32xf32, #tpu.memory_space<vmem>>, vector<1x32xf32>
    %71 = vector.shape_cast %70 : vector<1x32xf32> to vector<32xf32>
    %cst_46 = arith.constant dense<0.000000e+00> : vector<8xf32>
    %72 = vector.multi_reduction <add>, %67, %cst_46 [1] : vector<8x32xf32> to vector<8xf32>
    %73 = vector.shape_cast %72 : vector<8xf32> to vector<8x1xf32>
    %cst_47 = arith.constant 3.200000e+01 : f32
    %74 = vector.broadcast %cst_47 : f32 to vector<8x1xf32>
    %75 = arith.divf %73, %74 : vector<8x1xf32>
    %76 = vector.broadcast %75 : vector<8x1xf32> to vector<8x32xf32>
    %77 = arith.subf %67, %76 : vector<8x32xf32>
    %78 = arith.mulf %77, %77 : vector<8x32xf32>
    %cst_48 = arith.constant dense<0.000000e+00> : vector<8xf32>
    %79 = vector.multi_reduction <add>, %78, %cst_48 [1] : vector<8x32xf32> to vector<8xf32>
    %80 = vector.shape_cast %79 : vector<8xf32> to vector<8x1xf32>
    %cst_49 = arith.constant 3.200000e+01 : f32
    %81 = vector.broadcast %cst_49 : f32 to vector<8x1xf32>
    %82 = arith.divf %80, %81 : vector<8x1xf32>
    %83 = vector.broadcast %75 : vector<8x1xf32> to vector<8x32xf32>
    %84 = arith.subf %67, %83 : vector<8x32xf32>
    %cst_50 = arith.constant 9.99999974E-6 : f32
    %85 = vector.broadcast %cst_50 : f32 to vector<8x1xf32>
    %86 = arith.addf %82, %85 : vector<8x1xf32>
    %87 = math.rsqrt %86 : vector<8x1xf32>
    %88 = vector.broadcast %87 : vector<8x1xf32> to vector<8x32xf32>
    %89 = arith.mulf %84, %88 : vector<8x32xf32>
    %90 = vector.shape_cast %69 : vector<32xf32> to vector<1x32xf32>
    %91 = vector.broadcast %90 : vector<1x32xf32> to vector<8x32xf32>
    %92 = arith.mulf %89, %91 : vector<8x32xf32>
    %93 = vector.shape_cast %71 : vector<32xf32> to vector<1x32xf32>
    %94 = vector.broadcast %93 : vector<1x32xf32> to vector<8x32xf32>
    %95 = arith.addf %92, %94 : vector<8x32xf32>
    %c0_51 = arith.constant 0 : index
    %c0_52 = arith.constant 0 : index
    %96 = vector.load %arg14[%c0_51, %c0_52] : memref<32x64xf32, #tpu.memory_space<vmem>>, vector<32x64xf32>
    %cst_53 = arith.constant dense<0.000000e+00> : vector<8x64xf32>
    %97 = tpu.matmul %95, %96, %cst_53 {dimension_numbers = #tpu.dot_dimension_numbers<[1], [0], [0], [1], [0, 0, 1, 1], [], []>} : vector<8x32xf32>, vector<32x64xf32>, vector<8x64xf32> -> vector<8x64xf32>
    %c0_54 = arith.constant 0 : index
    %c0_55 = arith.constant 0 : index
    %98 = vector.load %arg15[%c0_54, %c0_55] : memref<1x64xf32, #tpu.memory_space<vmem>>, vector<1x64xf32>
    %99 = vector.shape_cast %98 : vector<1x64xf32> to vector<64xf32>
    %100 = vector.shape_cast %99 : vector<64xf32> to vector<1x64xf32>
    %101 = vector.broadcast %100 : vector<1x64xf32> to vector<8x64xf32>
    %102 = arith.addf %97, %101 : vector<8x64xf32>
    %cst_56 = arith.constant 5.000000e-01 : f32
    %103 = vector.broadcast %cst_56 : f32 to vector<8x64xf32>
    %104 = arith.mulf %103, %102 : vector<8x64xf32>
    %cst_57 = arith.constant 4.471500e-02 : f32
    %105 = vector.broadcast %cst_57 : f32 to vector<8x64xf32>
    %106 = arith.mulf %105, %102 : vector<8x64xf32>
    %107 = arith.mulf %106, %102 : vector<8x64xf32>
    %108 = arith.mulf %107, %102 : vector<8x64xf32>
    %109 = arith.addf %102, %108 : vector<8x64xf32>
    %cst_58 = arith.constant 0.797884583 : f32
    %110 = vector.broadcast %cst_58 : f32 to vector<8x64xf32>
    %111 = arith.mulf %110, %109 : vector<8x64xf32>
    %112 = math.tanh %111 : vector<8x64xf32>
    %cst_59 = arith.constant 1.000000e+00 : f32
    %113 = vector.broadcast %cst_59 : f32 to vector<8x64xf32>
    %114 = arith.addf %113, %112 : vector<8x64xf32>
    %115 = arith.mulf %104, %114 : vector<8x64xf32>
    %c0_60 = arith.constant 0 : index
    %c0_61 = arith.constant 0 : index
    %116 = vector.load %arg16[%c0_60, %c0_61] : memref<64x32xf32, #tpu.memory_space<vmem>>, vector<64x32xf32>
    %cst_62 = arith.constant dense<0.000000e+00> : vector<8x32xf32>
    %117 = tpu.matmul %115, %116, %cst_62 {dimension_numbers = #tpu.dot_dimension_numbers<[1], [0], [0], [1], [0, 0, 1, 1], [], []>} : vector<8x64xf32>, vector<64x32xf32>, vector<8x32xf32> -> vector<8x32xf32>
    %c0_63 = arith.constant 0 : index
    %c0_64 = arith.constant 0 : index
    %118 = vector.load %arg17[%c0_63, %c0_64] : memref<1x32xf32, #tpu.memory_space<vmem>>, vector<1x32xf32>
    %119 = vector.shape_cast %118 : vector<1x32xf32> to vector<32xf32>
    %120 = vector.shape_cast %119 : vector<32xf32> to vector<1x32xf32>
    %121 = vector.broadcast %120 : vector<1x32xf32> to vector<8x32xf32>
    %122 = arith.addf %117, %121 : vector<8x32xf32>
    %123 = arith.addf %67, %122 : vector<8x32xf32>
    %c0_65 = arith.constant 0 : index
    %c0_66 = arith.constant 0 : index
    %c0_67 = arith.constant 0 : index
    %124 = vector.load %arg18[%c0_65, %c0_66, %c0_67] : memref<1x8x32xf32, #tpu.memory_space<vmem>>, vector<1x8x32xf32>
    %125 = vector.shape_cast %124 : vector<1x8x32xf32> to vector<8x32xf32>
    %126 = vector.shape_cast %123 : vector<8x32xf32> to vector<1x8x32xf32>
    tpu.vector_store %arg18[%c0_65, %c0_66, %c0_67], %126 {strides = array<i32>} : memref<1x8x32xf32, #tpu.memory_space<vmem>>, vector<1x8x32xf32>,
    return
  }
  func.func @transform_0(%arg0: i32) -> (i32, i32, i32) {
    %c0_i32 = arith.constant 0 : i32
    %c0_i32_0 = arith.constant 0 : i32
    %c0_i32_1 = arith.constant 0 : i32
    return %arg0, %c0_i32, %c0_i32_0 : i32, i32, i32
  }
  func.func @transform_1(%arg0: i32) -> (i32, i32) {
    %c0_i32 = arith.constant 0 : i32
    %c0_i32_0 = arith.constant 0 : i32
    %c0_i32_1 = arith.constant 0 : i32
    return %c0_i32, %c0_i32_0 : i32, i32
  }
  func.func @transform_2(%arg0: i32) -> (i32, i32) {
    %c0_i32 = arith.constant 0 : i32
    %c0_i32_0 = arith.constant 0 : i32
    %c0_i32_1 = arith.constant 0 : i32
    return %c0_i32, %c0_i32_0 : i32, i32
  }
  func.func @transform_3(%arg0: i32) -> (i32, i32, i32) {
    %c0_i32 = arith.constant 0 : i32
    %c0_i32_0 = arith.constant 0 : i32
    %c0_i32_1 = arith.constant 0 : i32
    %c0_i32_2 = arith.constant 0 : i32
    return %c0_i32, %c0_i32_0, %c0_i32_1 : i32, i32, i32
  }
  func.func @transform_4(%arg0: i32) -> (i32, i32, i32) {
    %c0_i32 = arith.constant 0 : i32
    %c0_i32_0 = arith.constant 0 : i32
    %c0_i32_1 = arith.constant 0 : i32
    %c0_i32_2 = arith.constant 0 : i32
    return %c0_i32, %c0_i32_0, %c0_i32_1 : i32, i32, i32
  }
  func.func @transform_5(%arg0: i32) -> (i32, i32, i32) {
    %c0_i32 = arith.constant 0 : i32
    %c0_i32_0 = arith.constant 0 : i32
    %c0_i32_1 = arith.constant 0 : i32
    %c0_i32_2 = arith.constant 0 : i32
    return %c0_i32, %c0_i32_0, %c0_i32_1 : i32, i32, i32
  }
  func.func @transform_6(%arg0: i32) -> (i32, i32, i32) {
    %c0_i32 = arith.constant 0 : i32
    %c0_i32_0 = arith.constant 0 : i32
    %c0_i32_1 = arith.constant 0 : i32
    %c0_i32_2 = arith.constant 0 : i32
    return %c0_i32, %c0_i32_0, %c0_i32_1 : i32, i32, i32
  }
  func.func @transform_7(%arg0: i32) -> (i32, i32, i32) {
    %c0_i32 = arith.constant 0 : i32
    %c0_i32_0 = arith.constant 0 : i32
    %c0_i32_1 = arith.constant 0 : i32
    %c0_i32_2 = arith.constant 0 : i32
    return %c0_i32, %c0_i32_0, %c0_i32_1 : i32, i32, i32
  }
  func.func @transform_8(%arg0: i32) -> (i32, i32, i32) {
    %c0_i32 = arith.constant 0 : i32
    %c0_i32_0 = arith.constant 0 : i32
    %c0_i32_1 = arith.constant 0 : i32
    %c0_i32_2 = arith.constant 0 : i32
    return %c0_i32, %c0_i32_0, %c0_i32_1 : i32, i32, i32
  }
  func.func @transform_9(%arg0: i32) -> (i32, i32, i32) {
    %c0_i32 = arith.constant 0 : i32
    %c0_i32_0 = arith.constant 0 : i32
    %c0_i32_1 = arith.constant 0 : i32
    %c0_i32_2 = arith.constant 0 : i32
    return %c0_i32, %c0_i32_0, %c0_i32_1 : i32, i32, i32
  }
  func.func @transform_10(%arg0: i32) -> (i32, i32) {
    %c0_i32 = arith.constant 0 : i32
    %c0_i32_0 = arith.constant 0 : i32
    %c0_i32_1 = arith.constant 0 : i32
    return %c0_i32, %c0_i32_0 : i32, i32
  }
  func.func @transform_11(%arg0: i32) -> (i32, i32) {
    %c0_i32 = arith.constant 0 : i32
    %c0_i32_0 = arith.constant 0 : i32
    %c0_i32_1 = arith.constant 0 : i32
    return %c0_i32, %c0_i32_0 : i32, i32
  }
  func.func @transform_12(%arg0: i32) -> (i32, i32) {
    %c0_i32 = arith.constant 0 : i32
    %c0_i32_0 = arith.constant 0 : i32
    %c0_i32_1 = arith.constant 0 : i32
    return %c0_i32, %c0_i32_0 : i32, i32
  }
  func.func @transform_13(%arg0: i32) -> (i32, i32) {
    %c0_i32 = arith.constant 0 : i32
    %c0_i32_0 = arith.constant 0 : i32
    %c0_i32_1 = arith.constant 0 : i32
    return %c0_i32, %c0_i32_0 : i32, i32
  }
  func.func @transform_14(%arg0: i32) -> (i32, i32) {
    %c0_i32 = arith.constant 0 : i32
    %c0_i32_0 = arith.constant 0 : i32
    %c0_i32_1 = arith.constant 0 : i32
    return %c0_i32, %c0_i32_0 : i32, i32
  }
  func.func @transform_15(%arg0: i32) -> (i32, i32) {
    %c0_i32 = arith.constant 0 : i32
    %c0_i32_0 = arith.constant 0 : i32
    %c0_i32_1 = arith.constant 0 : i32
    return %c0_i32, %c0_i32_0 : i32, i32
  }
  func.func @transform_16(%arg0: i32) -> (i32, i32) {
    %c0_i32 = arith.constant 0 : i32
    %c0_i32_0 = arith.constant 0 : i32
    %c0_i32_1 = arith.constant 0 : i32
    return %c0_i32, %c0_i32_0 : i32, i32
  }
  func.func @transform_17(%arg0: i32) -> (i32, i32, i32) {
    %c0_i32 = arith.constant 0 : i32
    %c0_i32_0 = arith.constant 0 : i32
    %c0_i32_1 = arith.constant 0 : i32
    return %arg0, %c0_i32, %c0_i32_0 : i32, i32, i32
  }
}

</mosaic_0001>

<llo_original>
// kernel: tpu_custom_call.1
$region0: #{tpu_custom_call.1}
  #allocation0 [shape = 'u32[]', space=smem, size = 0x4, offset = 0x4, fixed_abs, tag = 'smem constant byte address 0x4 - core index']
  #allocation1 [shape = 'u32[72,128]{1,0:T(1,128)}', space=vmem, size = 0x9000, scoped, tag = 'internal scratch']
  %s0 = inlined_call_operand.vmem [shape: f32[2,8,32], index: 0, kind: input, shape index: {}]
  %s1 = inlined_call_operand.vmem [shape: f32[1,32], index: 1, kind: input, shape index: {}]
  %s2 = inlined_call_operand.vmem [shape: f32[1,32], index: 2, kind: input, shape index: {}]
  %s3 = inlined_call_operand.vmem [shape: f32[4,32,8], index: 3, kind: input, shape index: {}]
  %s4 = inlined_call_operand.vmem [shape: f32[4,1,8], index: 4, kind: input, shape index: {}]
  %s5 = inlined_call_operand.vmem [shape: f32[4,32,8], index: 5, kind: input, shape index: {}]
  %s6 = inlined_call_operand.vmem [shape: f32[4,1,8], index: 6, kind: input, shape index: {}]
  %s7 = inlined_call_operand.vmem [shape: f32[4,32,8], index: 7, kind: input, shape index: {}]
  %s8 = inlined_call_operand.vmem [shape: f32[4,1,8], index: 8, kind: input, shape index: {}]
  %s9 = inlined_call_operand.vmem [shape: f32[4,8,32], index: 9, kind: input, shape index: {}]
  %s10 = inlined_call_operand.vmem [shape: f32[1,32], index: 10, kind: input, shape index: {}]
  %s11 = inlined_call_operand.vmem [shape: f32[1,32], index: 11, kind: input, shape index: {}]
  %s12 = inlined_call_operand.vmem [shape: f32[1,32], index: 12, kind: input, shape index: {}]
  %s13 = inlined_call_operand.vmem [shape: f32[32,64], index: 13, kind: input, shape index: {}]
  %s14 = inlined_call_operand.vmem [shape: f32[1,64], index: 14, kind: input, shape index: {}]
  %s15 = inlined_call_operand.vmem [shape: f32[64,32], index: 15, kind: input, shape index: {}]
  %s16 = inlined_call_operand.vmem [shape: f32[1,32], index: 16, kind: input, shape index: {}]
  %s17 = inlined_call_operand.hbm [shape: f32[2,8,32], index: 17, kind: output, shape index: {}]
  %s18 = sld [smem:[#allocation0]]
  $region101: #{tpu_custom_call.1} parent=0
    _
  %s20 = ssub.s32 1, %s18
  %s21 = scalar_select 0, %s20, %s18
  $region1: #{tpu_custom_call.1} parent=0
    #allocation2 [shape = 'u8[8192]{0}', space=vmem, size = 0x2000, scoped, tag = 'output window, operand 0']
    #allocation3 [shape = 's32[2]{0}', space=sflag, size = 0x8, scoped, tag = 'scoped memory for tpu_custom_call.1']
    %22 = vsyncpa [#allocation3], 0
    %s23 = scalar_lea.sflag [#allocation3], 1
    %24 = vsyncpa %s23, 0
    loop: start=0, step=1, limit=4
    $region2: #{tpu_custom_call.1} parent=1 // loop_pre_header
      _
    $region3: #{tpu_custom_call.1} parent=1 // loop_header
      %s26 = sphi 0, %s30
      %p27 = scmp.ge.s32.totalorder %s26, 4
      %s36 = sphi 0, %s38
      %s39 = sphi 0, %s36
      %s40 = sphi 0, %s39
      %s56 = sphi 0, %s40
      %s60 = sphi 0, %s60
      %s62 = sphi 0, %s60
      %s63 = sphi 0, %s62
      %s77 = sphi 0, %s63
      %s81 = sphi 0, %s81
      %s83 = sphi 0, %s81
      %s84 = sphi 0, %s83
      %s98 = sphi 0, %s84
      %s102 = sphi 0, %s102
      %s104 = sphi 0, %s102
      %s105 = sphi 0, %s104
      %s119 = sphi 0, %s105
      %s123 = sphi 0, %s123
      %s125 = sphi 0, %s123
      %s126 = sphi 0, %s125
      %s140 = sphi 0, %s126
      %s144 = sphi 0, %s144
      %s146 = sphi 0, %s144
      %s147 = sphi 0, %s146
      %s161 = sphi 0, %s147
      %s165 = sphi 0, %s165
      %s167 = sphi 0, %s165
      %s168 = sphi 0, %s167
      %s182 = sphi 0, %s168
      %s186 = sphi 0, %s186
      %s188 = sphi 0, %s186
      %s189 = sphi 0, %s188
      %s203 = sphi 0, %s189
      %s207 = sphi 0, %s207
      %s209 = sphi 0, %s207
      %s210 = sphi 0, %s209
      %s224 = sphi 0, %s210
      %s228 = sphi 0, %s228
      %s230 = sphi 0, %s228
      %s231 = sphi 0, %s230
      %s245 = sphi 0, %s231
      %s249 = sphi 0, %s249
      %s251 = sphi 0, %s249
      %s252 = sphi 0, %s251
      %s266 = sphi 0, %s252
      %s270 = sphi 0, %s270
      %s272 = sphi 0, %s270
      %s273 = sphi 0, %s272
      %s287 = sphi 0, %s273
      %s291 = sphi 0, %s291
      %s293 = sphi 0, %s291
      %s294 = sphi 0, %s293
      %s308 = sphi 0, %s294
      %s312 = sphi 0, %s312
      %s314 = sphi 0, %s312
      %s315 = sphi 0, %s314
      %s329 = sphi 0, %s315
      %s333 = sphi 0, %s333
      %s335 = sphi 0, %s333
      %s336 = sphi 0, %s335
      %s350 = sphi 0, %s336
      %s354 = sphi 0, %s354
      %s356 = sphi 0, %s354
      %s357 = sphi 0, %s356
      %s371 = sphi 0, %s357
      %s375 = sphi 0, %s375
      %s377 = sphi 0, %s375
      %s378 = sphi 0, %s377
      %s392 = sphi 0, %s378
      %s398 = sphi 0, %s400
      %s401 = sphi 0, %s398
      %s402 = sphi 0, %s401
      %s418 = sphi 0, %s402
    $region4: #{tpu_custom_call.1} parent=1 // loop_header_branch
      %29 = sbr.rel (%p27) target = $region8
    $region5: #{tpu_custom_call.1} parent=1 // loop_body
      %s31 = ssub.s32 %s26, 1
      %s32 = ssub.s32 %s26, 2
      %s33 = sadd.s32 %s26, 1
      %s34 = ssub.s32 %s26, %s33
      %p35 = scmp.eq.s32.totalorder %s34, 0
      %s37 = sadd.s32 %s36, 1
      %s38 = scalar_select %p35, %s36, %s37
      %p41 = pneg %p35
      %p42 = scmp.eq.s32.totalorder %s26, 1
      %p43 = por %p41, %p42
      %p44 = scmp.ne.s32.totalorder %s36, %s39
      %p45 = scmp.eq.s32.totalorder %s26, 0
      %p46 = por %p44, %p45
      %p47 = scmp.ne.s32.totalorder %s36, %s39
      %p48 = scmp.eq.s32.totalorder %s31, 1
      %p49 = por %p47, %p48
      %p50 = scmp.ne.s32.totalorder %s39, %s40
      %p51 = scmp.eq.s32.totalorder %s31, 0
      %p52 = por %p50, %p51
      %p53 = scmp.ne.s32.totalorder %s39, %s40
      %p54 = scmp.eq.s32.totalorder %s32, 1
      %p55 = por %p53, %p54
      %p57 = scmp.ne.s32.totalorder %s40, %s56
      %p58 = scmp.eq.s32.totalorder %s32, 0
      %p59 = por %p57, %p58
      %s61 = sadd.s32 %s60, 1
      %p64 = scmp.eq.s32.totalorder %s26, 1
      %p65 = scmp.ne.s32.totalorder %s60, %s62
      %p66 = scmp.eq.s32.totalorder %s26, 0
      %p67 = por %p65, %p66
      %p68 = scmp.ne.s32.totalorder %s60, %s62
      %p69 = scmp.eq.s32.totalorder %s31, 1
      %p70 = por %p68, %p69
      %p71 = scmp.ne.s32.totalorder %s62, %s63
      %p72 = scmp.eq.s32.totalorder %s31, 0
      %p73 = por %p71, %p72
      %p74 = scmp.ne.s32.totalorder %s62, %s63
      %p75 = scmp.eq.s32.totalorder %s32, 1
      %p76 = por %p74, %p75
      %p78 = scmp.ne.s32.totalorder %s63, %s77
      %p79 = scmp.eq.s32.totalorder %s32, 0
      %p80 = por %p78, %p79
      %s82 = sadd.s32 %s81, 1
      %p85 = scmp.eq.s32.totalorder %s26, 1
      %p86 = scmp.ne.s32.totalorder %s81, %s83
      %p87 = scmp.eq.s32.totalorder %s26, 0
      %p88 = por %p86, %p87
      %p89 = scmp.ne.s32.totalorder %s81, %s83
      %p90 = scmp.eq.s32.totalorder %s31, 1
      %p91 = por %p89, %p90
      %p92 = scmp.ne.s32.totalorder %s83, %s84
      %p93 = scmp.eq.s32.totalorder %s31, 0
      %p94 = por %p92, %p93
      %p95 = scmp.ne.s32.totalorder %s83, %s84
      %p96 = scmp.eq.s32.totalorder %s32, 1
      %p97 = por %p95, %p96
      %p99 = scmp.ne.s32.totalorder %s84, %s98
      %p100 = scmp.eq.s32.totalorder %s32, 0
      %p101 = por %p99, %p100
      %s103 = sadd.s32 %s102, 1
      %p106 = scmp.eq.s32.totalorder %s26, 1
      %p107 = scmp.ne.s32.totalorder %s102, %s104
      %p108 = scmp.eq.s32.totalorder %s26, 0
      %p109 = por %p107, %p108
      %p110 = scmp.ne.s32.totalorder %s102, %s104
      %p111 = scmp.eq.s32.totalorder %s31, 1
      %p112 = por %p110, %p111
      %p113 = scmp.ne.s32.totalorder %s104, %s105
      %p114 = scmp.eq.s32.totalorder %s31, 0
      %p115 = por %p113, %p114
      %p116 = scmp.ne.s32.totalorder %s104, %s105
      %p117 = scmp.eq.s32.totalorder %s32, 1
      %p118 = por %p116, %p117
      %p120 = scmp.ne.s32.totalorder %s105, %s119
      %p121 = scmp.eq.s32.totalorder %s32, 0
      %p122 = por %p120, %p121
      %s124 = sadd.s32 %s123, 1
      %p127 = scmp.eq.s32.totalorder %s26, 1
      %p128 = scmp.ne.s32.totalorder %s123, %s125
      %p129 = scmp.eq.s32.totalorder %s26, 0
      %p130 = por %p128, %p129
      %p131 = scmp.ne.s32.totalorder %s123, %s125
      %p132 = scmp.eq.s32.totalorder %s31, 1
      %p133 = por %p131, %p132
      %p134 = scmp.ne.s32.totalorder %s125, %s126
      %p135 = scmp.eq.s32.totalorder %s31, 0
      %p136 = por %p134, %p135
      %p137 = scmp.ne.s32.totalorder %s125, %s126
      %p138 = scmp.eq.s32.totalorder %s32, 1
      %p139 = por %p137, %p138
      %p141 = scmp.ne.s32.totalorder %s126, %s140
      %p142 = scmp.eq.s32.totalorder %s32, 0
      %p143 = por %p141, %p142
      %s145 = sadd.s32 %s144, 1
      %p148 = scmp.eq.s32.totalorder %s26, 1
      %p149 = scmp.ne.s32.totalorder %s144, %s146
      %p150 = scmp.eq.s32.totalorder %s26, 0
      %p151 = por %p149, %p150
      %p152 = scmp.ne.s32.totalorder %s144, %s146
      %p153 = scmp.eq.s32.totalorder %s31, 1
      %p154 = por %p152, %p153
      %p155 = scmp.ne.s32.totalorder %s146, %s147
      %p156 = scmp.eq.s32.totalorder %s31, 0
      %p157 = por %p155, %p156
      %p158 = scmp.ne.s32.totalorder %s146, %s147
      %p159 = scmp.eq.s32.totalorder %s32, 1
      %p160 = por %p158, %p159
      %p162 = scmp.ne.s32.totalorder %s147, %s161
      %p163 = scmp.eq.s32.totalorder %s32, 0
      %p164 = por %p162, %p163
      %s166 = sadd.s32 %s165, 1
      %p169 = scmp.eq.s32.totalorder %s26, 1
      %p170 = scmp.ne.s32.totalorder %s165, %s167
      %p171 = scmp.eq.s32.totalorder %s26, 0
      %p172 = por %p170, %p171
      %p173 = scmp.ne.s32.totalorder %s165, %s167
      %p174 = scmp.eq.s32.totalorder %s31, 1
      %p175 = por %p173, %p174
      %p176 = scmp.ne.s32.totalorder %s167, %s168
      %p177 = scmp.eq.s32.totalorder %s31, 0
      %p178 = por %p176, %p177
      %p179 = scmp.ne.s32.totalorder %s167, %s168
      %p180 = scmp.eq.s32.totalorder %s32, 1
      %p181 = por %p179, %p180
      %p183 = scmp.ne.s32.totalorder %s168, %s182
      %p184 = scmp.eq.s32.totalorder %s32, 0
      %p185 = por %p183, %p184
      %s187 = sadd.s32 %s186, 1
      %p190 = scmp.eq.s32.totalorder %s26, 1
      %p191 = scmp.ne.s32.totalorder %s186, %s188
      %p192 = scmp.eq.s32.totalorder %s26, 0
      %p193 = por %p191, %p192
      %p194 = scmp.ne.s32.totalorder %s186, %s188
      %p195 = scmp.eq.s32.totalorder %s31, 1
      %p196 = por %p194, %p195
      %p197 = scmp.ne.s32.totalorder %s188, %s189
      %p198 = scmp.eq.s32.totalorder %s31, 0
      %p199 = por %p197, %p198
      %p200 = scmp.ne.s32.totalorder %s188, %s189
      %p201 = scmp.eq.s32.totalorder %s32, 1
      %p202 = por %p200, %p201
      %p204 = scmp.ne.s32.totalorder %s189, %s203
      %p205 = scmp.eq.s32.totalorder %s32, 0
      %p206 = por %p204, %p205
      %s208 = sadd.s32 %s207, 1
      %p211 = scmp.eq.s32.totalorder %s26, 1
      %p212 = scmp.ne.s32.totalorder %s207, %s209
      %p213 = scmp.eq.s32.totalorder %s26, 0
      %p214 = por %p212, %p213
      %p215 = scmp.ne.s32.totalorder %s207, %s209
      %p216 = scmp.eq.s32.totalorder %s31, 1
      %p217 = por %p215, %p216
      %p218 = scmp.ne.s32.totalorder %s209, %s210
      %p219 = scmp.eq.s32.totalorder %s31, 0
      %p220 = por %p218, %p219
      %p221 = scmp.ne.s32.totalorder %s209, %s210
      %p222 = scmp.eq.s32.totalorder %s32, 1
      %p223 = por %p221, %p222
      %p225 = scmp.ne.s32.totalorder %s210, %s224
      %p226 = scmp.eq.s32.totalorder %s32, 0
      %p227 = por %p225, %p226
      %s229 = sadd.s32 %s228, 1
      %p232 = scmp.eq.s32.totalorder %s26, 1
      %p233 = scmp.ne.s32.totalorder %s228, %s230
      %p234 = scmp.eq.s32.totalorder %s26, 0
      %p235 = por %p233, %p234
      %p236 = scmp.ne.s32.totalorder %s228, %s230
      %p237 = scmp.eq.s32.totalorder %s31, 1
      %p238 = por %p236, %p237
      %p239 = scmp.ne.s32.totalorder %s230, %s231
      %p240 = scmp.eq.s32.totalorder %s31, 0
      %p241 = por %p239, %p240
      %p242 = scmp.ne.s32.totalorder %s230, %s231
      %p243 = scmp.eq.s32.totalorder %s32, 1
      %p244 = por %p242, %p243
      %p246 = scmp.ne.s32.totalorder %s231, %s245
      %p247 = scmp.eq.s32.totalorder %s32, 0
      %p248 = por %p246, %p247
      %s250 = sadd.s32 %s249, 1
      %p253 = scmp.eq.s32.totalorder %s26, 1
      %p254 = scmp.ne.s32.totalorder %s249, %s251
      %p255 = scmp.eq.s32.totalorder %s26, 0
      %p256 = por %p254, %p255
      %p257 = scmp.ne.s32.totalorder %s249, %s251
      %p258 = scmp.eq.s32.totalorder %s31, 1
      %p259 = por %p257, %p258
      %p260 = scmp.ne.s32.totalorder %s251, %s252
      %p261 = scmp.eq.s32.totalorder %s31, 0
      %p262 = por %p260, %p261
      %p263 = scmp.ne.s32.totalorder %s251, %s252
      %p264 = scmp.eq.s32.totalorder %s32, 1
      %p265 = por %p263, %p264
      %p267 = scmp.ne.s32.totalorder %s252, %s266
      %p268 = scmp.eq.s32.totalorder %s32, 0
      %p269 = por %p267, %p268
      %s271 = sadd.s32 %s270, 1
      %p274 = scmp.eq.s32.totalorder %s26, 1
      %p275 = scmp.ne.s32.totalorder %s270, %s272
      %p276 = scmp.eq.s32.totalorder %s26, 0
      %p277 = por %p275, %p276
      %p278 = scmp.ne.s32.totalorder %s270, %s272
      %p279 = scmp.eq.s32.totalorder %s31, 1
      %p280 = por %p278, %p279
      %p281 = scmp.ne.s32.totalorder %s272, %s273
      %p282 = scmp.eq.s32.totalorder %s31, 0
      %p283 = por %p281, %p282
      %p284 = scmp.ne.s32.totalorder %s272, %s273
      %p285 = scmp.eq.s32.totalorder %s32, 1
      %p286 = por %p284, %p285
      %p288 = scmp.ne.s32.totalorder %s273, %s287
      %p289 = scmp.eq.s32.totalorder %s32, 0
      %p290 = por %p288, %p289
      %s292 = sadd.s32 %s291, 1
      %p295 = scmp.eq.s32.totalorder %s26, 1
      %p296 = scmp.ne.s32.totalorder %s291, %s293
      %p297 = scmp.eq.s32.totalorder %s26, 0
      %p298 = por %p296, %p297
      %p299 = scmp.ne.s32.totalorder %s291, %s293
      %p300 = scmp.eq.s32.totalorder %s31, 1
      %p301 = por %p299, %p300
      %p302 = scmp.ne.s32.totalorder %s293, %s294
      %p303 = scmp.eq.s32.totalorder %s31, 0
      %p304 = por %p302, %p303
      %p305 = scmp.ne.s32.totalorder %s293, %s294
      %p306 = scmp.eq.s32.totalorder %s32, 1
      %p307 = por %p305, %p306
      %p309 = scmp.ne.s32.totalorder %s294, %s308
      %p310 = scmp.eq.s32.totalorder %s32, 0
      %p311 = por %p309, %p310
      %s313 = sadd.s32 %s312, 1
      %p316 = scmp.eq.s32.totalorder %s26, 1
      %p317 = scmp.ne.s32.totalorder %s312, %s314
      %p318 = scmp.eq.s32.totalorder %s26, 0
      %p319 = por %p317, %p318
      %p320 = scmp.ne.s32.totalorder %s312, %s314
      %p321 = scmp.eq.s32.totalorder %s31, 1
      %p322 = por %p320, %p321
      %p323 = scmp.ne.s32.totalorder %s314, %s315
      %p324 = scmp.eq.s32.totalorder %s31, 0
      %p325 = por %p323, %p324
      %p326 = scmp.ne.s32.totalorder %s314, %s315
      %p327 = scmp.eq.s32.totalorder %s32, 1
      %p328 = por %p326, %p327
      %p330 = scmp.ne.s32.totalorder %s315, %s329
      %p331 = scmp.eq.s32.totalorder %s32, 0
      %p332 = por %p330, %p331
      %s334 = sadd.s32 %s333, 1
      %p337 = scmp.eq.s32.totalorder %s26, 1
      %p338 = scmp.ne.s32.totalorder %s333, %s335
      %p339 = scmp.eq.s32.totalorder %s26, 0
      %p340 = por %p338, %p339
      %p341 = scmp.ne.s32.totalorder %s333, %s335
      %p342 = scmp.eq.s32.totalorder %s31, 1
      %p343 = por %p341, %p342
      %p344 = scmp.ne.s32.totalorder %s335, %s336
      %p345 = scmp.eq.s32.totalorder %s31, 0
      %p346 = por %p344, %p345
      %p347 = scmp.ne.s32.totalorder %s335, %s336
      %p348 = scmp.eq.s32.totalorder %s32, 1
      %p349 = por %p347, %p348
      %p351 = scmp.ne.s32.totalorder %s336, %s350
      %p352 = scmp.eq.s32.totalorder %s32, 0
      %p353 = por %p351, %p352
      %s355 = sadd.s32 %s354, 1
      %p358 = scmp.eq.s32.totalorder %s26, 1
      %p359 = scmp.ne.s32.totalorder %s354, %s356
      %p360 = scmp.eq.s32.totalorder %s26, 0
      %p361 = por %p359, %p360
      %p362 = scmp.ne.s32.totalorder %s354, %s356
      %p363 = scmp.eq.s32.totalorder %s31, 1
      %p364 = por %p362, %p363
      %p365 = scmp.ne.s32.totalorder %s356, %s357
      %p366 = scmp.eq.s32.totalorder %s31, 0
      %p367 = por %p365, %p366
      %p368 = scmp.ne.s32.totalorder %s356, %s357
      %p369 = scmp.eq.s32.totalorder %s32, 1
      %p370 = por %p368, %p369
      %p372 = scmp.ne.s32.totalorder %s357, %s371
      %p373 = scmp.eq.s32.totalorder %s32, 0
      %p374 = por %p372, %p373
      %s376 = sadd.s32 %s375, 1
      %p379 = scmp.eq.s32.totalorder %s26, 1
      %p380 = scmp.ne.s32.totalorder %s375, %s377
      %p381 = scmp.eq.s32.totalorder %s26, 0
      %p382 = por %p380, %p381
      %p383 = scmp.ne.s32.totalorder %s375, %s377
      %p384 = scmp.eq.s32.totalorder %s31, 1
      %p385 = por %p383, %p384
      %p386 = scmp.ne.s32.totalorder %s377, %s378
      %p387 = scmp.eq.s32.totalorder %s31, 0
      %p388 = por %p386, %p387
      %p389 = scmp.ne.s32.totalorder %s377, %s378
      %p390 = scmp.eq.s32.totalorder %s32, 1
      %p391 = por %p389, %p390
      %p393 = scmp.ne.s32.totalorder %s378, %s392
      %p394 = scmp.eq.s32.totalorder %s32, 0
      %p395 = por %p393, %p394
      %s396 = ssub.s32 %s26, %s33
      %p397 = scmp.eq.s32.totalorder %s396, 0
      %s399 = sadd.s32 %s398, 1
      %s400 = scalar_select %p397, %s398, %s399
      %p403 = pneg %p397
      %p404 = scmp.eq.s32.totalorder %s26, 1
      %p405 = por %p403, %p404
      %p406 = scmp.ne.s32.totalorder %s398, %s401
      %p407 = scmp.eq.s32.totalorder %s26, 0
      %p408 = por %p406, %p407
      %p409 = scmp.ne.s32.totalorder %s398, %s401
      %p410 = scmp.eq.s32.totalorder %s31, 1
      %p411 = por %p409, %p410
      %p412 = scmp.ne.s32.totalorder %s401, %s402
      %p413 = scmp.eq.s32.totalorder %s31, 0
      %p414 = por %p412, %p413
      %p415 = scmp.ne.s32.totalorder %s401, %s402
      %p416 = scmp.eq.s32.totalorder %s32, 1
      %p417 = por %p415, %p416
      %p419 = scmp.ne.s32.totalorder %s402, %s418
      %p420 = scmp.eq.s32.totalorder %s32, 0
      %p421 = por %p419, %p420
      %p422 = scmp.le.s32.totalorder 1, %s26
      %p423 = scmp.lt.s32.totalorder %s26, 3
      %p424 = pnand %p422, %p423
      %p425 = pneg %p424
      // Predicated region
      $region9: #{tpu_custom_call.1} parent=5 // pred_check
        _
      $region10: #{tpu_custom_call.1} parent=5 // pred_check_branch
        %427 = sbr.rel (%p424) target = $region12
      $region11: #{tpu_custom_call.1} parent=5 // pred_region
        %s428 = ssub.s32 %s26, 1
        // Predicated region
        $region13: #{tpu_custom_call.1} parent=11 // pred_check
          %p429 = pneg %p73
        $region14: #{tpu_custom_call.1} parent=11 // pred_check_branch
          %431 = sbr.rel (%p429) target = $region16
        $region15: #{tpu_custom_call.1} parent=11 // pred_region
          _
        $region16: #{tpu_custom_call.1} parent=11 // pred_fallthru
          _
        // Predicated region
        $region17: #{tpu_custom_call.1} parent=11 // pred_check
          %p432 = pneg %p94
        $region18: #{tpu_custom_call.1} parent=11 // pred_check_branch
          %434 = sbr.rel (%p432) target = $region20
        $region19: #{tpu_custom_call.1} parent=11 // pred_region
          _
        $region20: #{tpu_custom_call.1} parent=11 // pred_fallthru
          _
        // Predicated region
        $region21: #{tpu_custom_call.1} parent=11 // pred_check
          %p435 = pneg %p115
        $region22: #{tpu_custom_call.1} parent=11 // pred_check_branch
          %437 = sbr.rel (%p435) target = $region24
        $region23: #{tpu_custom_call.1} parent=11 // pred_region
          _
        $region24: #{tpu_custom_call.1} parent=11 // pred_fallthru
          _
        // Predicated region
        $region25: #{tpu_custom_call.1} parent=11 // pred_check
          %p438 = pneg %p136
        $region26: #{tpu_custom_call.1} parent=11 // pred_check_branch
          %440 = sbr.rel (%p438) target = $region28
        $region27: #{tpu_custom_call.1} parent=11 // pred_region
          _
        $region28: #{tpu_custom_call.1} parent=11 // pred_fallthru
          _
        // Predicated region
        $region29: #{tpu_custom_call.1} parent=11 // pred_check
          %p441 = pneg %p157
        $region30: #{tpu_custom_call.1} parent=11 // pred_check_branch
          %443 = sbr.rel (%p441) target = $region32
        $region31: #{tpu_custom_call.1} parent=11 // pred_region
          _
        $region32: #{tpu_custom_call.1} parent=11 // pred_fallthru
          _
        // Predicated region
        $region33: #{tpu_custom_call.1} parent=11 // pred_check
          %p444 = pneg %p178
        $region34: #{tpu_custom_call.1} parent=11 // pred_check_branch
          %446 = sbr.rel (%p444) target = $region36
        $region35: #{tpu_custom_call.1} parent=11 // pred_region
          _
        $region36: #{tpu_custom_call.1} parent=11 // pred_fallthru
          _
        // Predicated region
        $region37: #{tpu_custom_call.1} parent=11 // pred_check
          %p447 = pneg %p199
        $region38: #{tpu_custom_call.1} parent=11 // pred_check_branch
          %449 = sbr.rel (%p447) target = $region40
        $region39: #{tpu_custom_call.1} parent=11 // pred_region
          _
        $region40: #{tpu_custom_call.1} parent=11 // pred_fallthru
          _
        // Predicated region
        $region41: #{tpu_custom_call.1} parent=11 // pred_check
          %p450 = pneg %p220
        $region42: #{tpu_custom_call.1} parent=11 // pred_check_branch
          %452 = sbr.rel (%p450) target = $region44
        $region43: #{tpu_custom_call.1} parent=11 // pred_region
          _
        $region44: #{tpu_custom_call.1} parent=11 // pred_fallthru
          _
        // Predicated region
        $region45: #{tpu_custom_call.1} parent=11 // pred_check
          %p453 = pneg %p241
        $region46: #{tpu_custom_call.1} parent=11 // pred_check_branch
          %455 = sbr.rel (%p453) target = $region48
        $region47: #{tpu_custom_call.1} parent=11 // pred_region
          _
        $region48: #{tpu_custom_call.1} parent=11 // pred_fallthru
          _
        // Predicated region
        $region49: #{tpu_custom_call.1} parent=11 // pred_check
          %p456 = pneg %p262
        $region50: #{tpu_custom_call.1} parent=11 // pred_check_branch
          %458 = sbr.rel (%p456) target = $region52
        $region51: #{tpu_custom_call.1} parent=11 // pred_region
          _
        $region52: #{tpu_custom_call.1} parent=11 // pred_fallthru
          _
        // Predicated region
        $region53: #{tpu_custom_call.1} parent=11 // pred_check
          %p459 = pneg %p283
        $region54: #{tpu_custom_call.1} parent=11 // pred_check_branch
          %461 = sbr.rel (%p459) target = $region56
        $region55: #{tpu_custom_call.1} parent=11 // pred_region
          _
        $region56: #{tpu_custom_call.1} parent=11 // pred_fallthru
          _
        // Predicated region
        $region57: #{tpu_custom_call.1} parent=11 // pred_check
          %p462 = pneg %p304
        $region58: #{tpu_custom_call.1} parent=11 // pred_check_branch
          %464 = sbr.rel (%p462) target = $region60
        $region59: #{tpu_custom_call.1} parent=11 // pred_region
          _
        $region60: #{tpu_custom_call.1} parent=11 // pred_fallthru
          _
        // Predicated region
        $region61: #{tpu_custom_call.1} parent=11 // pred_check
          %p465 = pneg %p325
        $region62: #{tpu_custom_call.1} parent=11 // pred_check_branch
          %467 = sbr.rel (%p465) target = $region64
        $region63: #{tpu_custom_call.1} parent=11 // pred_region
          _
        $region64: #{tpu_custom_call.1} parent=11 // pred_fallthru
          _
        // Predicated region
        $region65: #{tpu_custom_call.1} parent=11 // pred_check
          %p468 = pneg %p346
        $region66: #{tpu_custom_call.1} parent=11 // pred_check_branch
          %470 = sbr.rel (%p468) target = $region68
        $region67: #{tpu_custom_call.1} parent=11 // pred_region
          _
        $region68: #{tpu_custom_call.1} parent=11 // pred_fallthru
          _
        // Predicated region
        $region69: #{tpu_custom_call.1} parent=11 // pred_check
          %p471 = pneg %p367
        $region70: #{tpu_custom_call.1} parent=11 // pred_check_branch
          %473 = sbr.rel (%p471) target = $region72
        $region71: #{tpu_custom_call.1} parent=11 // pred_region
          _
        $region72: #{tpu_custom_call.1} parent=11 // pred_fallthru
          _
        // Predicated region
        $region73: #{tpu_custom_call.1} parent=11 // pred_check
          %p474 = pneg %p388
        $region74: #{tpu_custom_call.1} parent=11 // pred_check_branch
          %476 = sbr.rel (%p474) target = $region76
        $region75: #{tpu_custom_call.1} parent=11 // pred_region
          _
        $region76: #{tpu_custom_call.1} parent=11 // pred_fallthru
          _
      $region12: #{tpu_custom_call.1} parent=5 // pred_fallthru
        _
      %p477 = scmp.lt.s32.totalorder %s26, 2
      // Predicated region
      $region77: #{tpu_custom_call.1} parent=5 // pred_check
        %p478 = pneg %p477
      $region78: #{tpu_custom_call.1} parent=5 // pred_check_branch
        %480 = sbr.rel (%p478) target = $region80
      $region79: #{tpu_custom_call.1} parent=5 // pred_region
        // Predicated region
        $region81: #{tpu_custom_call.1} parent=79 // pred_check
          %p481 = pneg %p46
        $region82: #{tpu_custom_call.1} parent=79 // pred_check_branch
          %483 = sbr.rel (%p481) target = $region84
        $region83: #{tpu_custom_call.1} parent=79 // pred_region
          %p484 = scmp.lt.s32.totalorder %s26, 1
          %s485 = scalar_select %p484, %s26, 1
          %s486 = smul.addr %s485, 8
          %s487 = scalar_lea.vmem %s0, %s486
        $region84: #{tpu_custom_call.1} parent=79 // pred_fallthru
          _
      $region80: #{tpu_custom_call.1} parent=5 // pred_fallthru
        _
      %p488 = scmp.le.s32.totalorder 1, %s26
      %p489 = scmp.lt.s32.totalorder %s26, 3
      %p490 = pnand %p488, %p489
      %p491 = pneg %p490
      // Predicated region
      $region85: #{tpu_custom_call.1} parent=5 // pred_check
        _
      $region86: #{tpu_custom_call.1} parent=5 // pred_check_branch
        %493 = sbr.rel (%p490) target = $region88
      $region87: #{tpu_custom_call.1} parent=5 // pred_region
        %s494 = ssub.s32 %s26, 1
        %p495 = scmp.lt.s32.totalorder %s31, 1
        %s496 = scalar_select %p495, %s31, 1
        %s497 = smul.addr %s496, 8
        %s498 = scalar_lea.vmem %s0, %s497
        %p499 = pneg %p52
        %p500 = pneg %p49
        %p501 = pneg %p73
        %p502 = pneg %p70
        %p503 = pneg %p94
        %p504 = pneg %p91
        %p505 = pneg %p115
        %p506 = pneg %p112
        %p507 = pneg %p136
        %p508 = pneg %p133
        %p509 = pneg %p157
        %p510 = pneg %p154
        %p511 = pneg %p178
        %p512 = pneg %p175
        %p513 = pneg %p199
        %p514 = pneg %p196
        %p515 = pneg %p220
        %p516 = pneg %p217
        %p517 = pneg %p241
        %p518 = pneg %p238
        %p519 = pneg %p262
        %p520 = pneg %p259
        %p521 = pneg %p283
        %p522 = pneg %p280
        %p523 = pneg %p304
        %p524 = pneg %p301
        %p525 = pneg %p325
        %p526 = pneg %p322
        %p527 = pneg %p346
        %p528 = pneg %p343
        %p529 = pneg %p367
        %p530 = pneg %p364
        %p531 = pneg %p388
        %p532 = pneg %p385
        %p533 = pneg %p414
        %p534 = pneg %p411
        %s535 = sand.u32 %s401, 1
        %s536 = scalar_lea.sflag [#allocation3], %s535
        %s537 = sand.u32 %s401, 1
        %s538 = smul.addr %s537, 8
        %s539 = scalar_lea.vmem [#allocation2], %s538
        %p540 = scmp.lt.s32.totalorder %s31, 1
        %s541 = scalar_select %p540, %s31, 1
        %s542 = smul.addr %s541, 8
        %s543 = scalar_lea.vmem %s0, %s542
        %v544 = vld [vmem:[%s543] sm:$0xff]
        %v545 = vld [vmem:[%s1] sm:$0x1]
        %v546 = vld [vmem:[%s2] sm:$0x1]
        %vm547 = vcmask 261120
        %v548 = vsel %vm547, %v544, 0.0
        %549 = vadd.xlane.f32.xlu0 %v548
        %v550 = vpop.xlane.xlu0 %549
        %v551 = vrcp.pop 32.0
        %v552 = vmul.f32 32.0, %v551
        %v553 = vsub.f32 1.0, %v552
        %v554 = vmul.f32 %v551, %v553
        %v555 = vadd.f32 %v551, %v554
        %vm556 = vweird.f32 %v551
        %v557 = vsel %vm556, %v551, %v555
        %v558 = vmul.f32 %v550, %v557
        %v559 = vsub.f32 %v544, %v558
        %v560 = vmul.f32 %v559, %v559
        %v561 = vsel %vm547, %v560, 0.0
        %562 = vadd.xlane.f32.xlu0 %v561
        %v563 = vpop.xlane.xlu0 %562
        %v564 = vmul.f32 %v563, %v557
        %v565 = vadd.f32 %v564, 1e-05
        %v566 = vrsqrt.pop %v565
        %v567 = vmul.f32 %v566, %v565
        %v568 = vmul.f32 %v567, %v566
        %v569 = vmul.f32 0.5, %v568
        %v570 = vsub.f32 1.5, %v569
        %v571 = vmul.f32 %v566, %v570
        %vm572 = vweird.f32 %v565
        %vm573 = vweird.f32 %v566
        %vm574 = vmor %vm572, %vm573
        %v575 = vsel %vm574, %v566, %v571
        %v576 = vmul.f32 %v559, %v575
        %v578 = vperm.slane %v545, 0
        %v580 = vmul.f32 %v576, %v578
        %v582 = vperm.slane %v546, 0
        %v584 = vadd.f32 %v580, %v582
        %v585 = vld [vmem:[%s3] sm:$0xff]
        %v586 = vld [vmem:[%s3 + $0x8] sm:$0xff]
        %v587 = vld [vmem:[%s3 + $0x10] sm:$0xff]
        %v588 = vld [vmem:[%s3 + $0x18] sm:$0xff]
        %v589 = vld [vmem:[%s3 + $0x20] sm:$0xff]
        %v590 = vld [vmem:[%s3 + $0x28] sm:$0xff]
        %v591 = vld [vmem:[%s3 + $0x30] sm:$0xff]
        %v592 = vld [vmem:[%s3 + $0x38] sm:$0xff]
        %v593 = vld [vmem:[%s3 + $0x40] sm:$0xff]
        %v594 = vld [vmem:[%s3 + $0x48] sm:$0xff]
        %v595 = vld [vmem:[%s3 + $0x50] sm:$0xff]
        %v596 = vld [vmem:[%s3 + $0x58] sm:$0xff]
        %v597 = vld [vmem:[%s3 + $0x60] sm:$0xff]
        %v598 = vld [vmem:[%s3 + $0x68] sm:$0xff]
        %v599 = vld [vmem:[%s3 + $0x70] sm:$0xff]
        %v600 = vld [vmem:[%s3 + $0x78] sm:$0xff]
        %v601 = vld [vmem:[%s4] sm:$0x1]
        %v602 = vld [vmem:[%s4 + $0x1] sm:$0x1]
        %v603 = vld [vmem:[%s4 + $0x2] sm:$0x1]
        %v604 = vld [vmem:[%s4 + $0x3] sm:$0x1]
        %v609 = vperm.slane %v601, 0
        %v610 = vperm.slane %v602, 0
        %v611 = vperm.slane %v603, 0
        %v612 = vperm.slane %v604, 0
        %v618 = vsel %vm547, %v584, 0
        %620 = vmatpush.msra.mxu0 0.0
        %621 = vmatpush.msra.mxu0 0.0
        %622 = vmatpush.msra.mxu0 0.0
        %623 = vmatpush.msra.mxu0 0.0
        %624 = vmatpush.msra.mxu0 0.0
        %625 = vmatpush.msra.mxu0 0.0
        %626 = vmatpush.msra.mxu0 0.0
        %627 = vmatpush.msra.mxu0 0.0
        %628 = vmatpush.msra.mxu0 0.0
        %629 = vmatpush.msra.mxu0 0.0
        %630 = vmatpush.msra.mxu0 0.0
        %631 = vmatpush.msra.mxu0 0.0
        %632 = vmatpush.msra.mxu0 %v588
        %633 = vmatpush.msra.mxu0 %v587
        %634 = vmatpush.msra.mxu0 %v586
        %635 = vmatpush.msra.mxu0 %v585
        %636 = vmatmul.f32.gmra.mxu0 %v618
        %v637 = vpop.f32.mrf.mxu0
        %v638 = vadd.f32 %v609, %v637
        %639 = vdwg.mxu0
        %640 = vmatpush.msra.mxu0 0.0
        %641 = vmatpush.msra.mxu0 0.0
        %642 = vmatpush.msra.mxu0 0.0
        %643 = vmatpush.msra.mxu0 0.0
        %644 = vmatpush.msra.mxu0 0.0
        %645 = vmatpush.msra.mxu0 0.0
        %646 = vmatpush.msra.mxu0 0.0
        %647 = vmatpush.msra.mxu0 0.0
        %648 = vmatpush.msra.mxu0 0.0
        %649 = vmatpush.msra.mxu0 0.0
        %650 = vmatpush.msra.mxu0 0.0
        %651 = vmatpush.msra.mxu0 0.0
        %652 = vmatpush.msra.mxu0 %v592
        %653 = vmatpush.msra.mxu0 %v591
        %654 = vmatpush.msra.mxu0 %v590
        %655 = vmatpush.msra.mxu0 %v589
        %656 = vmatmul.f32.gmra.mxu0 %v618
        %v657 = vpop.f32.mrf.mxu0
        %v658 = vadd.f32 %v610, %v657
        %659 = vdwg.mxu0
        %660 = vmatpush.msra.mxu0 0.0
        %661 = vmatpush.msra.mxu0 0.0
        %662 = vmatpush.msra.mxu0 0.0
        %663 = vmatpush.msra.mxu0 0.0
        %664 = vmatpush.msra.mxu0 0.0
        %665 = vmatpush.msra.mxu0 0.0
        %666 = vmatpush.msra.mxu0 0.0
        %667 = vmatpush.msra.mxu0 0.0
        %668 = vmatpush.msra.mxu0 0.0
        %669 = vmatpush.msra.mxu0 0.0
        %670 = vmatpush.msra.mxu0 0.0
        %671 = vmatpush.msra.mxu0 0.0
        %672 = vmatpush.msra.mxu0 %v596
        %673 = vmatpush.msra.mxu0 %v595
        %674 = vmatpush.msra.mxu0 %v594
        %675 = vmatpush.msra.mxu0 %v593
        %676 = vmatmul.f32.gmra.mxu0 %v618
        %v677 = vpop.f32.mrf.mxu0
        %v678 = vadd.f32 %v611, %v677
        %679 = vdwg.mxu0
        %680 = vmatpush.msra.mxu0 0.0
        %681 = vmatpush.msra.mxu0 0.0
        %682 = vmatpush.msra.mxu0 0.0
        %683 = vmatpush.msra.mxu0 0.0
        %684 = vmatpush.msra.mxu0 0.0
        %685 = vmatpush.msra.mxu0 0.0
        %686 = vmatpush.msra.mxu0 0.0
        %687 = vmatpush.msra.mxu0 0.0
        %688 = vmatpush.msra.mxu0 0.0
        %689 = vmatpush.msra.mxu0 0.0
        %690 = vmatpush.msra.mxu0 0.0
        %691 = vmatpush.msra.mxu0 0.0
        %692 = vmatpush.msra.mxu0 %v600
        %693 = vmatpush.msra.mxu0 %v599
        %694 = vmatpush.msra.mxu0 %v598
        %695 = vmatpush.msra.mxu0 %v597
        %696 = vmatmul.f32.gmra.mxu0 %v618
        %v697 = vpop.f32.mrf.mxu0
        %v698 = vadd.f32 %v612, %v697
        %699 = vdwg.mxu0
        %v700 = vld [vmem:[%s5] sm:$0xff]
        %v701 = vld [vmem:[%s5 + $0x8] sm:$0xff]
        %v702 = vld [vmem:[%s5 + $0x10] sm:$0xff]
        %v703 = vld [vmem:[%s5 + $0x18] sm:$0xff]
        %v704 = vld [vmem:[%s5 + $0x20] sm:$0xff]
        %v705 = vld [vmem:[%s5 + $0x28] sm:$0xff]
        %v706 = vld [vmem:[%s5 + $0x30] sm:$0xff]
        %v707 = vld [vmem:[%s5 + $0x38] sm:$0xff]
        %v708 = vld [vmem:[%s5 + $0x40] sm:$0xff]
        %v709 = vld [vmem:[%s5 + $0x48] sm:$0xff]
        %v710 = vld [vmem:[%s5 + $0x50] sm:$0xff]
        %v711 = vld [vmem:[%s5 + $0x58] sm:$0xff]
        %v712 = vld [vmem:[%s5 + $0x60] sm:$0xff]
        %v713 = vld [vmem:[%s5 + $0x68] sm:$0xff]
        %v714 = vld [vmem:[%s5 + $0x70] sm:$0xff]
        %v715 = vld [vmem:[%s5 + $0x78] sm:$0xff]
        %v716 = vld [vmem:[%s6] sm:$0x1]
        %v717 = vld [vmem:[%s6 + $0x1] sm:$0x1]
        %v718 = vld [vmem:[%s6 + $0x2] sm:$0x1]
        %v719 = vld [vmem:[%s6 + $0x3] sm:$0x1]
        %v724 = vperm.slane %v716, 0
        %v725 = vperm.slane %v717, 0
        %v726 = vperm.slane %v718, 0
        %v727 = vperm.slane %v719, 0
        %732 = vmatpush.msra.mxu0 0.0
        %733 = vmatpush.msra.mxu0 0.0
        %734 = vmatpush.msra.mxu0 0.0
        %735 = vmatpush.msra.mxu0 0.0
        %736 = vmatpush.msra.mxu0 0.0
        %737 = vmatpush.msra.mxu0 0.0
        %738 = vmatpush.msra.mxu0 0.0
        %739 = vmatpush.msra.mxu0 0.0
        %740 = vmatpush.msra.mxu0 0.0
        %741 = vmatpush.msra.mxu0 0.0
        %742 = vmatpush.msra.mxu0 0.0
        %743 = vmatpush.msra.mxu0 0.0
        %744 = vmatpush.msra.mxu0 %v703
        %745 = vmatpush.msra.mxu0 %v702
        %746 = vmatpush.msra.mxu0 %v701
        %747 = vmatpush.msra.mxu0 %v700
        %748 = vmatmul.f32.gmra.mxu0 %v618
        %v749 = vpop.f32.mrf.mxu0
        %v750 = vadd.f32 %v724, %v749
        %751 = vdwg.mxu0
        %752 = vmatpush.msra.mxu0 0.0
        %753 = vmatpush.msra.mxu0 0.0
        %754 = vmatpush.msra.mxu0 0.0
        %755 = vmatpush.msra.mxu0 0.0
        %756 = vmatpush.msra.mxu0 0.0
        %757 = vmatpush.msra.mxu0 0.0
        %758 = vmatpush.msra.mxu0 0.0
        %759 = vmatpush.msra.mxu0 0.0
        %760 = vmatpush.msra.mxu0 0.0
        %761 = vmatpush.msra.mxu0 0.0
        %762 = vmatpush.msra.mxu0 0.0
        %763 = vmatpush.msra.mxu0 0.0
        %764 = vmatpush.msra.mxu0 %v707
        %765 = vmatpush.msra.mxu0 %v706
        %766 = vmatpush.msra.mxu0 %v705
        %767 = vmatpush.msra.mxu0 %v704
        %768 = vmatmul.f32.gmra.mxu0 %v618
        %v769 = vpop.f32.mrf.mxu0
        %v770 = vadd.f32 %v725, %v769
        %771 = vdwg.mxu0
        %772 = vmatpush.msra.mxu0 0.0
        %773 = vmatpush.msra.mxu0 0.0
        %774 = vmatpush.msra.mxu0 0.0
        %775 = vmatpush.msra.mxu0 0.0
        %776 = vmatpush.msra.mxu0 0.0
        %777 = vmatpush.msra.mxu0 0.0
        %778 = vmatpush.msra.mxu0 0.0
        %779 = vmatpush.msra.mxu0 0.0
        %780 = vmatpush.msra.mxu0 0.0
        %781 = vmatpush.msra.mxu0 0.0
        %782 = vmatpush.msra.mxu0 0.0
        %783 = vmatpush.msra.mxu0 0.0
        %784 = vmatpush.msra.mxu0 %v711
        %785 = vmatpush.msra.mxu0 %v710
        %786 = vmatpush.msra.mxu0 %v709
        %787 = vmatpush.msra.mxu0 %v708
        %788 = vmatmul.f32.gmra.mxu0 %v618
        %v789 = vpop.f32.mrf.mxu0
        %v790 = vadd.f32 %v726, %v789
        %791 = vdwg.mxu0
        %792 = vmatpush.msra.mxu0 0.0
        %793 = vmatpush.msra.mxu0 0.0
        %794 = vmatpush.msra.mxu0 0.0
        %795 = vmatpush.msra.mxu0 0.0
        %796 = vmatpush.msra.mxu0 0.0
        %797 = vmatpush.msra.mxu0 0.0
        %798 = vmatpush.msra.mxu0 0.0
        %799 = vmatpush.msra.mxu0 0.0
        %800 = vmatpush.msra.mxu0 0.0
        %801 = vmatpush.msra.mxu0 0.0
        %802 = vmatpush.msra.mxu0 0.0
        %803 = vmatpush.msra.mxu0 0.0
        %804 = vmatpush.msra.mxu0 %v715
        %805 = vmatpush.msra.mxu0 %v714
        %806 = vmatpush.msra.mxu0 %v713
        %807 = vmatpush.msra.mxu0 %v712
        %808 = vmatmul.f32.gmra.mxu0 %v618
        %v809 = vpop.f32.mrf.mxu0
        %v810 = vadd.f32 %v727, %v809
        %811 = vdwg.mxu0
        %v812 = vld [vmem:[%s7] sm:$0xff]
        %v813 = vld [vmem:[%s7 + $0x8] sm:$0xff]
        %v814 = vld [vmem:[%s7 + $0x10] sm:$0xff]
        %v815 = vld [vmem:[%s7 + $0x18] sm:$0xff]
        %v816 = vld [vmem:[%s7 + $0x20] sm:$0xff]
        %v817 = vld [vmem:[%s7 + $0x28] sm:$0xff]
        %v818 = vld [vmem:[%s7 + $0x30] sm:$0xff]
        %v819 = vld [vmem:[%s7 + $0x38] sm:$0xff]
        %v820 = vld [vmem:[%s7 + $0x40] sm:$0xff]
        %v821 = vld [vmem:[%s7 + $0x48] sm:$0xff]
        %v822 = vld [vmem:[%s7 + $0x50] sm:$0xff]
        %v823 = vld [vmem:[%s7 + $0x58] sm:$0xff]
        %v824 = vld [vmem:[%s7 + $0x60] sm:$0xff]
        %v825 = vld [vmem:[%s7 + $0x68] sm:$0xff]
        %v826 = vld [vmem:[%s7 + $0x70] sm:$0xff]
        %v827 = vld [vmem:[%s7 + $0x78] sm:$0xff]
        %v828 = vld [vmem:[%s8] sm:$0x1]
        %v829 = vld [vmem:[%s8 + $0x1] sm:$0x1]
        %v830 = vld [vmem:[%s8 + $0x2] sm:$0x1]
        %v831 = vld [vmem:[%s8 + $0x3] sm:$0x1]
        %v836 = vperm.slane %v828, 0
        %v837 = vperm.slane %v829, 0
        %v838 = vperm.slane %v830, 0
        %v839 = vperm.slane %v831, 0
        %844 = vmatpush.msra.mxu0 0.0
        %845 = vmatpush.msra.mxu0 0.0
        %846 = vmatpush.msra.mxu0 0.0
        %847 = vmatpush.msra.mxu0 0.0
        %848 = vmatpush.msra.mxu0 0.0
        %849 = vmatpush.msra.mxu0 0.0
        %850 = vmatpush.msra.mxu0 0.0
        %851 = vmatpush.msra.mxu0 0.0
        %852 = vmatpush.msra.mxu0 0.0
        %853 = vmatpush.msra.mxu0 0.0
        %854 = vmatpush.msra.mxu0 0.0
        %855 = vmatpush.msra.mxu0 0.0
        %856 = vmatpush.msra.mxu0 %v815
        %857 = vmatpush.msra.mxu0 %v814
        %858 = vmatpush.msra.mxu0 %v813
        %859 = vmatpush.msra.mxu0 %v812
        %860 = vmatmul.f32.gmra.mxu0 %v618
        %v861 = vpop.f32.mrf.mxu0
        %v862 = vadd.f32 %v836, %v861
        %863 = vdwg.mxu0
        %864 = vmatpush.msra.mxu0 0.0
        %865 = vmatpush.msra.mxu0 0.0
        %866 = vmatpush.msra.mxu0 0.0
        %867 = vmatpush.msra.mxu0 0.0
        %868 = vmatpush.msra.mxu0 0.0
        %869 = vmatpush.msra.mxu0 0.0
        %870 = vmatpush.msra.mxu0 0.0
        %871 = vmatpush.msra.mxu0 0.0
        %872 = vmatpush.msra.mxu0 0.0
        %873 = vmatpush.msra.mxu0 0.0
        %874 = vmatpush.msra.mxu0 0.0
        %875 = vmatpush.msra.mxu0 0.0
        %876 = vmatpush.msra.mxu0 %v819
        %877 = vmatpush.msra.mxu0 %v818
        %878 = vmatpush.msra.mxu0 %v817
        %879 = vmatpush.msra.mxu0 %v816
        %880 = vmatmul.f32.gmra.mxu0 %v618
        %v881 = vpop.f32.mrf.mxu0
        %v882 = vadd.f32 %v837, %v881
        %883 = vdwg.mxu0
        %884 = vmatpush.msra.mxu0 0.0
        %885 = vmatpush.msra.mxu0 0.0
        %886 = vmatpush.msra.mxu0 0.0
        %887 = vmatpush.msra.mxu0 0.0
        %888 = vmatpush.msra.mxu0 0.0
        %889 = vmatpush.msra.mxu0 0.0
        %890 = vmatpush.msra.mxu0 0.0
        %891 = vmatpush.msra.mxu0 0.0
        %892 = vmatpush.msra.mxu0 0.0
        %893 = vmatpush.msra.mxu0 0.0
        %894 = vmatpush.msra.mxu0 0.0
        %895 = vmatpush.msra.mxu0 0.0
        %896 = vmatpush.msra.mxu0 %v823
        %897 = vmatpush.msra.mxu0 %v822
        %898 = vmatpush.msra.mxu0 %v821
        %899 = vmatpush.msra.mxu0 %v820
        %900 = vmatmul.f32.gmra.mxu0 %v618
        %v901 = vpop.f32.mrf.mxu0
        %v902 = vadd.f32 %v838, %v901
        %903 = vdwg.mxu0
        %904 = vmatpush.msra.mxu0 0.0
        %905 = vmatpush.msra.mxu0 0.0
        %906 = vmatpush.msra.mxu0 0.0
        %907 = vmatpush.msra.mxu0 0.0
        %908 = vmatpush.msra.mxu0 0.0
        %909 = vmatpush.msra.mxu0 0.0
        %910 = vmatpush.msra.mxu0 0.0
        %911 = vmatpush.msra.mxu0 0.0
        %912 = vmatpush.msra.mxu0 0.0
        %913 = vmatpush.msra.mxu0 0.0
        %914 = vmatpush.msra.mxu0 0.0
        %915 = vmatpush.msra.mxu0 0.0
        %916 = vmatpush.msra.mxu0 %v827
        %917 = vmatpush.msra.mxu0 %v826
        %918 = vmatpush.msra.mxu0 %v825
        %919 = vmatpush.msra.mxu0 %v824
        %920 = vmatmul.f32.gmra.mxu0 %v618
        %v921 = vpop.f32.mrf.mxu0
        %v922 = vadd.f32 %v839, %v921
        %923 = vdwg.mxu0
        %vm924 = vcmask 64512
        %v926 = vsel %vm924, %v638, 0
        %v929 = vsel %vm924, %v750, 0
        %931 = vmatpush.xpose.msra.mxu0 0.0
        %932 = vmatpush.xpose.msra.mxu0 0.0
        %933 = vmatpush.xpose.msra.mxu0 0.0
        %934 = vmatpush.xpose.msra.mxu0 0.0
        %935 = vmatpush.xpose.msra.mxu0 0.0
        %936 = vmatpush.xpose.msra.mxu0 0.0
        %937 = vmatpush.xpose.msra.mxu0 0.0
        %938 = vmatpush.xpose.msra.mxu0 0.0
        %939 = vmatpush.xpose.msra.mxu0 0.0
        %940 = vmatpush.xpose.msra.mxu0 0.0
        %941 = vmatpush.xpose.msra.mxu0 0.0
        %942 = vmatpush.xpose.msra.mxu0 0.0
        %943 = vmatpush.xpose.msra.mxu0 0.0
        %944 = vmatpush.xpose.msra.mxu0 0.0
        %945 = vmatpush.xpose.msra.mxu0 0.0
        %946 = vmatpush.xpose.msra.mxu0 %v929
        %947 = vmatmul.f32.gmra.mxu0 %v926
        %v948 = vpop.f32.mrf.mxu0
        %v949 = vadd.f32 0.0, %v948
        %950 = vdwg.mxu0
        %v952 = vsel %vm924, %v658, 0
        %v955 = vsel %vm924, %v770, 0
        %957 = vmatpush.xpose.msra.mxu0 0.0
        %958 = vmatpush.xpose.msra.mxu0 0.0
        %959 = vmatpush.xpose.msra.mxu0 0.0
        %960 = vmatpush.xpose.msra.mxu0 0.0
        %961 = vmatpush.xpose.msra.mxu0 0.0
        %962 = vmatpush.xpose.msra.mxu0 0.0
        %963 = vmatpush.xpose.msra.mxu0 0.0
        %964 = vmatpush.xpose.msra.mxu0 0.0
        %965 = vmatpush.xpose.msra.mxu0 0.0
        %966 = vmatpush.xpose.msra.mxu0 0.0
        %967 = vmatpush.xpose.msra.mxu0 0.0
        %968 = vmatpush.xpose.msra.mxu0 0.0
        %969 = vmatpush.xpose.msra.mxu0 0.0
        %970 = vmatpush.xpose.msra.mxu0 0.0
        %971 = vmatpush.xpose.msra.mxu0 0.0
        %972 = vmatpush.xpose.msra.mxu0 %v955
        %973 = vmatmul.f32.gmra.mxu0 %v952
        %v974 = vpop.f32.mrf.mxu0
        %v975 = vadd.f32 0.0, %v974
        %976 = vdwg.mxu0
        %v978 = vsel %vm924, %v678, 0
        %v981 = vsel %vm924, %v790, 0
        %983 = vmatpush.xpose.msra.mxu0 0.0
        %984 = vmatpush.xpose.msra.mxu0 0.0
        %985 = vmatpush.xpose.msra.mxu0 0.0
        %986 = vmatpush.xpose.msra.mxu0 0.0
        %987 = vmatpush.xpose.msra.mxu0 0.0
        %988 = vmatpush.xpose.msra.mxu0 0.0
        %989 = vmatpush.xpose.msra.mxu0 0.0
        %990 = vmatpush.xpose.msra.mxu0 0.0
        %991 = vmatpush.xpose.msra.mxu0 0.0
        %992 = vmatpush.xpose.msra.mxu0 0.0
        %993 = vmatpush.xpose.msra.mxu0 0.0
        %994 = vmatpush.xpose.msra.mxu0 0.0
        %995 = vmatpush.xpose.msra.mxu0 0.0
        %996 = vmatpush.xpose.msra.mxu0 0.0
        %997 = vmatpush.xpose.msra.mxu0 0.0
        %998 = vmatpush.xpose.msra.mxu0 %v981
        %999 = vmatmul.f32.gmra.mxu0 %v978
        %v1000 = vpop.f32.mrf.mxu0
        %v1001 = vadd.f32 0.0, %v1000
        %1002 = vdwg.mxu0
        %v1004 = vsel %vm924, %v698, 0
        %v1007 = vsel %vm924, %v810, 0
        %1009 = vmatpush.xpose.msra.mxu0 0.0
        %1010 = vmatpush.xpose.msra.mxu0 0.0
        %1011 = vmatpush.xpose.msra.mxu0 0.0
        %1012 = vmatpush.xpose.msra.mxu0 0.0
        %1013 = vmatpush.xpose.msra.mxu0 0.0
        %1014 = vmatpush.xpose.msra.mxu0 0.0
        %1015 = vmatpush.xpose.msra.mxu0 0.0
        %1016 = vmatpush.xpose.msra.mxu0 0.0
        %1017 = vmatpush.xpose.msra.mxu0 0.0
        %1018 = vmatpush.xpose.msra.mxu0 0.0
        %1019 = vmatpush.xpose.msra.mxu0 0.0
        %1020 = vmatpush.xpose.msra.mxu0 0.0
        %1021 = vmatpush.xpose.msra.mxu0 0.0
        %1022 = vmatpush.xpose.msra.mxu0 0.0
        %1023 = vmatpush.xpose.msra.mxu0 0.0
        %1024 = vmatpush.xpose.msra.mxu0 %v1007
        %1025 = vmatmul.f32.gmra.mxu0 %v1004
        %v1026 = vpop.f32.mrf.mxu0
        %v1027 = vadd.f32 0.0, %v1026
        %1028 = vdwg.mxu0
        %v1029 = vsel %vm924, %v949, -inf
        %1030 = vmax.xlane.f32.xlu0 %v1029
        %v1031 = vpop.xlane.xlu0 %1030
        %v1032 = vsel %vm924, %v975, -inf
        %1033 = vmax.xlane.f32.xlu0 %v1032
        %v1034 = vpop.xlane.xlu0 %1033
        %v1035 = vsel %vm924, %v1001, -inf
        %1036 = vmax.xlane.f32.xlu0 %v1035
        %v1037 = vpop.xlane.xlu0 %1036
        %v1038 = vsel %vm924, %v1027, -inf
        %1039 = vmax.xlane.f32.xlu0 %v1038
        %v1040 = vpop.xlane.xlu0 %1039
        %v1041 = vsub.f32 %v949, %v1031
        %v1042 = vsub.f32 %v975, %v1034
        %v1043 = vsub.f32 %v1001, %v1037
        %v1044 = vsub.f32 %v1027, %v1040
        %v1045 = vmul.f32 %v1041, 1.442695
        %v1046 = vpow.pop %v1045
        %v1047 = vmul.f32 %v1042, 1.442695
        %v1048 = vpow.pop %v1047
        %v1049 = vmul.f32 %v1043, 1.442695
        %v1050 = vpow.pop %v1049
        %v1051 = vmul.f32 %v1044, 1.442695
        %v1052 = vpow.pop %v1051
        %v1053 = vsel %vm924, %v1046, 0.0
        %1054 = vadd.xlane.f32.xlu0 %v1053
        %v1055 = vpop.xlane.xlu0 %1054
        %v1056 = vsel %vm924, %v1048, 0.0
        %1057 = vadd.xlane.f32.xlu0 %v1056
        %v1058 = vpop.xlane.xlu0 %1057
        %v1059 = vsel %vm924, %v1050, 0.0
        %1060 = vadd.xlane.f32.xlu0 %v1059
        %v1061 = vpop.xlane.xlu0 %1060
        %v1062 = vsel %vm924, %v1052, 0.0
        %1063 = vadd.xlane.f32.xlu0 %v1062
        %v1064 = vpop.xlane.xlu0 %1063
        %v1065 = vrcp.pop %v1055
        %v1066 = vrcp.pop %v1058
        %v1067 = vrcp.pop %v1061
        %v1068 = vrcp.pop %v1064
        %v1069 = vmul.f32 %v1046, %v1065
        %v1070 = vmul.f32 %v1048, %v1066
        %v1071 = vmul.f32 %v1050, %v1067
        %v1072 = vmul.f32 %v1052, %v1068
        %v1074 = vsel %vm924, %v1069, 0
        %1076 = vmatpush.msra.mxu0 0.0
        %1077 = vmatpush.msra.mxu0 0.0
        %1078 = vmatpush.msra.mxu0 0.0
        %1079 = vmatpush.msra.mxu0 0.0
        %1080 = vmatpush.msra.mxu0 0.0
        %1081 = vmatpush.msra.mxu0 0.0
        %1082 = vmatpush.msra.mxu0 0.0
        %1083 = vmatpush.msra.mxu0 0.0
        %1084 = vmatpush.msra.mxu0 0.0
        %1085 = vmatpush.msra.mxu0 0.0
        %1086 = vmatpush.msra.mxu0 0.0
        %1087 = vmatpush.msra.mxu0 0.0
        %1088 = vmatpush.msra.mxu0 0.0
        %1089 = vmatpush.msra.mxu0 0.0
        %1090 = vmatpush.msra.mxu0 0.0
        %1091 = vmatpush.msra.mxu0 %v862
        %1092 = vmatmul.f32.gmra.mxu0 %v1074
        %v1093 = vpop.f32.mrf.mxu0
        %v1094 = vadd.f32 0.0, %v1093
        %1095 = vdwg.mxu0
        %v1097 = vsel %vm924, %v1070, 0
        %1099 = vmatpush.msra.mxu0 0.0
        %1100 = vmatpush.msra.mxu0 0.0
        %1101 = vmatpush.msra.mxu0 0.0
        %1102 = vmatpush.msra.mxu0 0.0
        %1103 = vmatpush.msra.mxu0 0.0
        %1104 = vmatpush.msra.mxu0 0.0
        %1105 = vmatpush.msra.mxu0 0.0
        %1106 = vmatpush.msra.mxu0 0.0
        %1107 = vmatpush.msra.mxu0 0.0
        %1108 = vmatpush.msra.mxu0 0.0
        %1109 = vmatpush.msra.mxu0 0.0
        %1110 = vmatpush.msra.mxu0 0.0
        %1111 = vmatpush.msra.mxu0 0.0
        %1112 = vmatpush.msra.mxu0 0.0
        %1113 = vmatpush.msra.mxu0 0.0
        %1114 = vmatpush.msra.mxu0 %v882
        %1115 = vmatmul.f32.gmra.mxu0 %v1097
        %v1116 = vpop.f32.mrf.mxu0
        %v1117 = vadd.f32 0.0, %v1116
        %1118 = vdwg.mxu0
        %v1120 = vsel %vm924, %v1071, 0
        %1122 = vmatpush.msra.mxu0 0.0
        %1123 = vmatpush.msra.mxu0 0.0
        %1124 = vmatpush.msra.mxu0 0.0
        %1125 = vmatpush.msra.mxu0 0.0
        %1126 = vmatpush.msra.mxu0 0.0
        %1127 = vmatpush.msra.mxu0 0.0
        %1128 = vmatpush.msra.mxu0 0.0
        %1129 = vmatpush.msra.mxu0 0.0
        %1130 = vmatpush.msra.mxu0 0.0
        %1131 = vmatpush.msra.mxu0 0.0
        %1132 = vmatpush.msra.mxu0 0.0
        %1133 = vmatpush.msra.mxu0 0.0
        %1134 = vmatpush.msra.mxu0 0.0
        %1135 = vmatpush.msra.mxu0 0.0
        %1136 = vmatpush.msra.mxu0 0.0
        %1137 = vmatpush.msra.mxu0 %v902
        %1138 = vmatmul.f32.gmra.mxu0 %v1120
        %v1139 = vpop.f32.mrf.mxu0
        %v1140 = vadd.f32 0.0, %v1139
        %1141 = vdwg.mxu0
        %v1143 = vsel %vm924, %v1072, 0
        %1145 = vmatpush.msra.mxu0 0.0
        %1146 = vmatpush.msra.mxu0 0.0
        %1147 = vmatpush.msra.mxu0 0.0
        %1148 = vmatpush.msra.mxu0 0.0
        %1149 = vmatpush.msra.mxu0 0.0
        %1150 = vmatpush.msra.mxu0 0.0
        %1151 = vmatpush.msra.mxu0 0.0
        %1152 = vmatpush.msra.mxu0 0.0
        %1153 = vmatpush.msra.mxu0 0.0
        %1154 = vmatpush.msra.mxu0 0.0
        %1155 = vmatpush.msra.mxu0 0.0
        %1156 = vmatpush.msra.mxu0 0.0
        %1157 = vmatpush.msra.mxu0 0.0
        %1158 = vmatpush.msra.mxu0 0.0
        %1159 = vmatpush.msra.mxu0 0.0
        %1160 = vmatpush.msra.mxu0 %v922
        %1161 = vmatmul.f32.gmra.mxu0 %v1143
        %v1162 = vpop.f32.mrf.mxu0
        %v1163 = vadd.f32 0.0, %v1162
        %1164 = vdwg.mxu0
        %v1165 = vld [vmem:[%s9] sm:$0xff]
        %v1166 = vld [vmem:[%s9 + $0x8] sm:$0xff]
        %v1167 = vld [vmem:[%s9 + $0x10] sm:$0xff]
        %v1168 = vld [vmem:[%s9 + $0x18] sm:$0xff]
        %v1170 = vsel %vm924, %v1094, 0
        %1172 = vmatpush.msra.mxu0 0.0
        %1173 = vmatpush.msra.mxu0 0.0
        %1174 = vmatpush.msra.mxu0 0.0
        %1175 = vmatpush.msra.mxu0 0.0
        %1176 = vmatpush.msra.mxu0 0.0
        %1177 = vmatpush.msra.mxu0 0.0
        %1178 = vmatpush.msra.mxu0 0.0
        %1179 = vmatpush.msra.mxu0 0.0
        %1180 = vmatpush.msra.mxu0 0.0
        %1181 = vmatpush.msra.mxu0 0.0
        %1182 = vmatpush.msra.mxu0 0.0
        %1183 = vmatpush.msra.mxu0 0.0
        %1184 = vmatpush.msra.mxu0 0.0
        %1185 = vmatpush.msra.mxu0 0.0
        %1186 = vmatpush.msra.mxu0 0.0
        %1187 = vmatpush.msra.mxu0 %v1165
        %1188 = vmatmul.f32.gmra.mxu0 %v1170
        %v1189 = vpop.f32.mrf.mxu0
        %v1190 = vadd.f32 0.0, %v1189
        %1191 = vdwg.mxu0
        %v1193 = vsel %vm924, %v1117, 0
        %1195 = vmatpush.msra.mxu0 0.0
        %1196 = vmatpush.msra.mxu0 0.0
        %1197 = vmatpush.msra.mxu0 0.0
        %1198 = vmatpush.msra.mxu0 0.0
        %1199 = vmatpush.msra.mxu0 0.0
        %1200 = vmatpush.msra.mxu0 0.0
        %1201 = vmatpush.msra.mxu0 0.0
        %1202 = vmatpush.msra.mxu0 0.0
        %1203 = vmatpush.msra.mxu0 0.0
        %1204 = vmatpush.msra.mxu0 0.0
        %1205 = vmatpush.msra.mxu0 0.0
        %1206 = vmatpush.msra.mxu0 0.0
        %1207 = vmatpush.msra.mxu0 0.0
        %1208 = vmatpush.msra.mxu0 0.0
        %1209 = vmatpush.msra.mxu0 0.0
        %1210 = vmatpush.msra.mxu0 %v1166
        %1211 = vmatmul.f32.gmra.mxu0 %v1193
        %v1212 = vpop.f32.mrf.mxu0
        %v1213 = vadd.f32 0.0, %v1212
        %1214 = vdwg.mxu0
        %v1216 = vsel %vm924, %v1140, 0
        %1218 = vmatpush.msra.mxu0 0.0
        %1219 = vmatpush.msra.mxu0 0.0
        %1220 = vmatpush.msra.mxu0 0.0
        %1221 = vmatpush.msra.mxu0 0.0
        %1222 = vmatpush.msra.mxu0 0.0
        %1223 = vmatpush.msra.mxu0 0.0
        %1224 = vmatpush.msra.mxu0 0.0
        %1225 = vmatpush.msra.mxu0 0.0
        %1226 = vmatpush.msra.mxu0 0.0
        %1227 = vmatpush.msra.mxu0 0.0
        %1228 = vmatpush.msra.mxu0 0.0
        %1229 = vmatpush.msra.mxu0 0.0
        %1230 = vmatpush.msra.mxu0 0.0
        %1231 = vmatpush.msra.mxu0 0.0
        %1232 = vmatpush.msra.mxu0 0.0
        %1233 = vmatpush.msra.mxu0 %v1167
        %1234 = vmatmul.f32.gmra.mxu0 %v1216
        %v1235 = vpop.f32.mrf.mxu0
        %v1236 = vadd.f32 0.0, %v1235
        %1237 = vdwg.mxu0
        %v1239 = vsel %vm924, %v1163, 0
        %1241 = vmatpush.msra.mxu0 0.0
        %1242 = vmatpush.msra.mxu0 0.0
        %1243 = vmatpush.msra.mxu0 0.0
        %1244 = vmatpush.msra.mxu0 0.0
        %1245 = vmatpush.msra.mxu0 0.0
        %1246 = vmatpush.msra.mxu0 0.0
        %1247 = vmatpush.msra.mxu0 0.0
        %1248 = vmatpush.msra.mxu0 0.0
        %1249 = vmatpush.msra.mxu0 0.0
        %1250 = vmatpush.msra.mxu0 0.0
        %1251 = vmatpush.msra.mxu0 0.0
        %1252 = vmatpush.msra.mxu0 0.0
        %1253 = vmatpush.msra.mxu0 0.0
        %1254 = vmatpush.msra.mxu0 0.0
        %1255 = vmatpush.msra.mxu0 0.0
        %1256 = vmatpush.msra.mxu0 %v1168
        %1257 = vmatmul.f32.gmra.mxu0 %v1239
        %v1258 = vpop.f32.mrf.mxu0
        %v1259 = vadd.f32 0.0, %v1258
        %1260 = vdwg.mxu0
        %v1261 = vsel %vm547, %v1190, 0.0
        %v1262 = vsel %vm547, %v1213, 0.0
        %v1263 = vadd.f32 %v1261, %v1262
        %v1264 = vsel %vm547, %v1236, 0.0
        %v1265 = vadd.f32 %v1263, %v1264
        %v1266 = vsel %vm547, %v1259, 0.0
        %v1267 = vadd.f32 %v1265, %v1266
        %v1268 = vld [vmem:[%s10] sm:$0x1]
        %v1270 = vperm.slane %v1268, 0
        %v1272 = vadd.f32 %v1267, %v1270
        %v1273 = vadd.f32 %v1272, %v544
        %v1274 = vld [vmem:[%s11] sm:$0x1]
        %v1275 = vld [vmem:[%s12] sm:$0x1]
        %v1276 = vsel %vm547, %v1273, 0.0
        %1277 = vadd.xlane.f32.xlu0 %v1276
        %v1278 = vpop.xlane.xlu0 %1277
        %v1279 = vmul.f32 %v1278, %v557
        %v1280 = vsub.f32 %v1273, %v1279
        %v1281 = vmul.f32 %v1280, %v1280
        %v1282 = vsel %vm547, %v1281, 0.0
        %1283 = vadd.xlane.f32.xlu0 %v1282
        %v1284 = vpop.xlane.xlu0 %1283
        %v1285 = vmul.f32 %v1284, %v557
        %v1286 = vadd.f32 %v1285, 1e-05
        %v1287 = vrsqrt.pop %v1286
        %v1288 = vmul.f32 %v1287, %v1286
        %v1289 = vmul.f32 %v1288, %v1287
        %v1290 = vmul.f32 0.5, %v1289
        %v1291 = vsub.f32 1.5, %v1290
        %v1292 = vmul.f32 %v1287, %v1291
        %vm1293 = vweird.f32 %v1286
        %vm1294 = vweird.f32 %v1287
        %vm1295 = vmor %vm1293, %vm1294
        %v1296 = vsel %vm1295, %v1287, %v1292
        %v1297 = vmul.f32 %v1280, %v1296
        %v1299 = vperm.slane %v1274, 0
        %v1301 = vmul.f32 %v1297, %v1299
        %v1303 = vperm.slane %v1275, 0
        %v1305 = vadd.f32 %v1301, %v1303
        %v1306 = vld [vmem:[%s13] sm:$0xff]
        %v1307 = vld [vmem:[%s13 + $0x8] sm:$0xff]
        %v1308 = vld [vmem:[%s13 + $0x10] sm:$0xff]
        %v1309 = vld [vmem:[%s13 + $0x18] sm:$0xff]
        %v1310 = vld [vmem:[%s14] sm:$0x1]
        %v1312 = vperm.slane %v1310, 0
        %v1315 = vsel %vm547, %v1305, 0
        %1317 = vmatpush.msra.mxu0 0.0
        %1318 = vmatpush.msra.mxu0 0.0
        %1319 = vmatpush.msra.mxu0 0.0
        %1320 = vmatpush.msra.mxu0 0.0
        %1321 = vmatpush.msra.mxu0 0.0
        %1322 = vmatpush.msra.mxu0 0.0
        %1323 = vmatpush.msra.mxu0 0.0
        %1324 = vmatpush.msra.mxu0 0.0
        %1325 = vmatpush.msra.mxu0 0.0
        %1326 = vmatpush.msra.mxu0 0.0
        %1327 = vmatpush.msra.mxu0 0.0
        %1328 = vmatpush.msra.mxu0 0.0
        %1329 = vmatpush.msra.mxu0 %v1309
        %1330 = vmatpush.msra.mxu0 %v1308
        %1331 = vmatpush.msra.mxu0 %v1307
        %1332 = vmatpush.msra.mxu0 %v1306
        %1333 = vmatmul.f32.gmra.mxu0 %v1315
        %v1334 = vpop.f32.mrf.mxu0
        %v1335 = vadd.f32 %v1312, %v1334
        %1336 = vdwg.mxu0
        %v1337 = vmul.f32 %v1335, 0.5
        %v1338 = vmul.f32 %v1335, 0.044715
        %v1339 = vmul.f32 %v1338, %v1335
        %v1340 = vmul.f32 %v1339, %v1335
        %v1341 = vadd.f32 %v1335, %v1340
        %v1342 = vmul.f32 %v1341, 0.7978846
        %v1343 = vtanh.pop %v1342
        %v1344 = vadd.f32 %v1343, 1.0
        %v1345 = vmul.f32 %v1337, %v1344
        %v1346 = vld [vmem:[%s15] sm:$0xff]
        %v1347 = vld [vmem:[%s15 + $0x8] sm:$0xff]
        %v1348 = vld [vmem:[%s15 + $0x10] sm:$0xff]
        %v1349 = vld [vmem:[%s15 + $0x18] sm:$0xff]
        %v1350 = vld [vmem:[%s15 + $0x20] sm:$0xff]
        %v1351 = vld [vmem:[%s15 + $0x28] sm:$0xff]
        %v1352 = vld [vmem:[%s15 + $0x30] sm:$0xff]
        %v1353 = vld [vmem:[%s15 + $0x38] sm:$0xff]
        %v1354 = vld [vmem:[%s16] sm:$0x1]
        %v1356 = vperm.slane %v1354, 0
        %vm1358 = vcmask 523264
        %v1360 = vsel %vm1358, %v1345, 0
        %1362 = vmatpush.msra.mxu0 0.0
        %1363 = vmatpush.msra.mxu0 0.0
        %1364 = vmatpush.msra.mxu0 0.0
        %1365 = vmatpush.msra.mxu0 0.0
        %1366 = vmatpush.msra.mxu0 0.0
        %1367 = vmatpush.msra.mxu0 0.0
        %1368 = vmatpush.msra.mxu0 0.0
        %1369 = vmatpush.msra.mxu0 0.0
        %1370 = vmatpush.msra.mxu0 %v1353
        %1371 = vmatpush.msra.mxu0 %v1352
        %1372 = vmatpush.msra.mxu0 %v1351
        %1373 = vmatpush.msra.mxu0 %v1350
        %1374 = vmatpush.msra.mxu0 %v1349
        %1375 = vmatpush.msra.mxu0 %v1348
        %1376 = vmatpush.msra.mxu0 %v1347
        %1377 = vmatpush.msra.mxu0 %v1346
        %1378 = vmatmul.f32.gmra.mxu0 %v1360
        %v1379 = vpop.f32.mrf.mxu0
        %v1380 = vadd.f32 %v1356, %v1379
        %1381 = vdwg.mxu0
        %v1382 = vadd.f32 %v1273, %v1380
        %1383 = vst.msk [vmem:[%s539] sm:$0xff] %vm547, %v1382
        %s1384 = sand.u32 %s401, 1
        %s1385 = scalar_lea.sflag [#allocation3], %s1384
        %s1386 = sand.u32 %s401, 1
        %s1387 = smul.addr %s1386, 8
        %s1388 = scalar_lea.vmem [#allocation2], %s1387
        // Predicated region
        $region89: #{tpu_custom_call.1} parent=87 // pred_check
          %p1389 = pneg %p411
        $region90: #{tpu_custom_call.1} parent=87 // pred_check_branch
          %1391 = sbr.rel (%p1389) target = $region92
        $region91: #{tpu_custom_call.1} parent=87 // pred_region
          %1393 = vsyncadd %s1385, 0
          %s1394 = smul.addr %s31, 8
          %s1395 = scalar_lea.hbm %s17, %s1394
          %s1397 = sshll.u32 %s1388, 4
          %s1398 = int_to_ptr.vmem [resolvable:$true] %s1397
          %s1399 = sshll.u32 %s1395, 4
          %s1400 = int_to_ptr.hbm [resolvable:$true] %s1399
          %1402 = dma.vmem_to_hbm [thread:$0]  %s1398, 128, %s1400, %s1385
        $region92: #{tpu_custom_call.1} parent=87 // pred_fallthru
          _
      $region88: #{tpu_custom_call.1} parent=5 // pred_fallthru
        _
      %p1403 = scmp.le.s32.totalorder 2, %s26
      // Predicated region
      $region93: #{tpu_custom_call.1} parent=5 // pred_check
        %p1404 = pneg %p1403
      $region94: #{tpu_custom_call.1} parent=5 // pred_check_branch
        %1406 = sbr.rel (%p1404) target = $region96
      $region95: #{tpu_custom_call.1} parent=5 // pred_region
        %s1407 = ssub.s32 %s26, 2
        // Predicated region
        $region97: #{tpu_custom_call.1} parent=95 // pred_check
          %p1408 = pneg %p417
        $region98: #{tpu_custom_call.1} parent=95 // pred_check_branch
          %1410 = sbr.rel (%p1408) target = $region100
        $region99: #{tpu_custom_call.1} parent=95 // pred_region
          %s1411 = sand.u32 %s402, 1
          %s1412 = scalar_lea.sflag [#allocation3], %s1411
          %s1413 = sand.u32 %s402, 1
          %s1414 = smul.addr %s1413, 8
          %s1415 = scalar_lea.vmem [#allocation2], %s1414
          %1417 = dma.done %s1412, 128
        $region100: #{tpu_custom_call.1} parent=95 // pred_fallthru
          _
      $region96: #{tpu_custom_call.1} parent=5 // pred_fallthru
        _
    $region6: #{tpu_custom_call.1} parent=1 // loop_footer
      %s30 = sadd.s32 1, %s26
    $region7: #{tpu_custom_call.1} parent=1 // loop_footer_branch
      %25 = sbr.rel target = $region3
    $region8: #{tpu_custom_call.1} parent=1 // loop_exit
      _
    %1418 = vsyncpa [#allocation3], 1
    %s1419 = scalar_lea.sflag [#allocation3], 1
    %1420 = vsyncpa %s1419, 1

</llo_original>
